<compile_context>
chip_gen: v7x
topology: tpu7x:2x2x1
jax: 0.10.0
libtpu: 0.0.40
codegen_flags: <defaults>
</compile_context>

<pallas_src>
import numpy as np
import jax
import jax.numpy as jnp
from jax.experimental import pallas as pl
from jax.experimental.pallas import tpu as pltpu


# ------------------------------- kernel -----------------------------------

def _overlap_sq_kernel(xre_ref, xim_ref, mre_ref, mim_ref, cre_ref, cim_ref,
                       out_ref, tre_acc, tim_acc):
    """Grid step i processes rows [i*tm, (i+1)*tm) of M.

    xre/xim : (n0, tm)   column block of code0 (Re / Im)
    mre/mim : (tm, D)    row block of M = kron(U_0..U_{n-1}) (Re / Im)
    cre/cim : (D, n0)    conj(code1)^T (Re / Im), resident across the grid
    out     : (1, 1)     SMEM scalar ||T||_F^2
    tre/tim : (n0, n0)   VMEM accumulators for T = code0 @ M @ conj(code1)^T
    """
    i = pl.program_id(0)

    @pl.when(i == 0)
    def _():
        tre_acc[...] = jnp.zeros_like(tre_acc)
        tim_acc[...] = jnp.zeros_like(tim_acc)

    dot = lambda a, b: jnp.dot(a, b, preferred_element_type=jnp.float32)

    mre = mre_ref[...]
    mim = mim_ref[...]
    cre = cre_ref[...]
    cim = cim_ref[...]

    # W_blk = M[blk, :] @ conj(code1)^T   (complex matmul as 4 real MXU dots,
    # with the (tm, D) tile of M streamed as LHS rows).
    wre = dot(mre, cre) - dot(mim, cim)
    wim = dot(mre, cim) + dot(mim, cre)

    # T += code0[:, blk] @ W_blk          (tiny (n0, tm) x (tm, n0) dots)
    xre = xre_ref[...]
    xim = xim_ref[...]
    tre_acc[...] += dot(xre, wre) - dot(xim, wim)
    tim_acc[...] += dot(xre, wim) + dot(xim, wre)

    @pl.when(i == pl.num_programs(0) - 1)
    def _():
        tre = tre_acc[...]
        tim = tim_acc[...]
        out_ref[0, 0] = jnp.sum(tre * tre + tim * tim)


def overlap_sq_pallas(xre, xim, mre, mim, cre, cim, *, tm=None):
    """||code0 @ M @ conj(code1)^T||_F^2 as a (1,1) f32 array."""
    n0, d = xre.shape
    if tm is None:
        tm = min(128, d)          # D = 2**num_qubit, so tm always divides d
    assert d % tm == 0
    grid = (d // tm,)

    grid_spec = pltpu.PrefetchScalarGridSpec(
        num_scalar_prefetch=0,
        grid=grid,
        in_specs=[
            pl.BlockSpec((n0, tm), lambda i: (0, i)),   # Re(code0) column block
            pl.BlockSpec((n0, tm), lambda i: (0, i)),   # Im(code0) column block
            pl.BlockSpec((tm, d), lambda i: (i, 0)),    # Re(M) row block
            pl.BlockSpec((tm, d), lambda i: (i, 0)),    # Im(M) row block
            pl.BlockSpec((d, n0), lambda i: (0, 0)),    # Re(conj(code1)^T), resident
            pl.BlockSpec((d, n0), lambda i: (0, 0)),    # Im(conj(code1)^T), resident
        ],
        out_specs=pl.BlockSpec((1, 1), lambda i: (0, 0),
                               memory_space=pltpu.MemorySpace.SMEM),
        scratch_shapes=[pltpu.VMEM((n0, n0), jnp.float32),
                        pltpu.VMEM((n0, n0), jnp.float32)],
    )
    out = pl.pallas_call(
        _overlap_sq_kernel,
        out_shape=jax.ShapeDtypeStruct((1, 1), jnp.float32),
        grid_spec=grid_spec,
        compiler_params=pltpu.CompilerParams(
            dimension_semantics=("arbitrary",),        # reduction axis
            vmem_limit_bytes=32 * 1024 * 1024,         # headroom over v5e default
        ),
    )(xre, xim, mre, mim, cre, cim)
    return out


# ---------------- device-side operand construction (jitted) ----------------

@jax.jit
def qecc_equal_overlap_sq(params, code0_re, code0_im, code1_re, code1_im):
    """Builds the per-qubit SO(2,C) rotations and their kron product on device
    (f32 real/imag pairs), then calls the Pallas kernel. Returns ||T||_F^2."""
    num_qubit = int(code0_re.shape[1]).bit_length() - 1

    # U_k = [[cos a, sin a], [-sin a, cos a]],  a = p0 + i p1 (complex angle).
    ar = params[:, 0]
    ai = params[:, 1]
    cos_re = jnp.cos(ar) * jnp.cosh(ai)
    cos_im = -jnp.sin(ar) * jnp.sinh(ai)
    sin_re = jnp.sin(ar) * jnp.cosh(ai)
    sin_im = jnp.cos(ar) * jnp.sinh(ai)
    u_re = jnp.stack([jnp.stack([cos_re, sin_re], axis=-1),
                      jnp.stack([-sin_re, cos_re], axis=-1)], axis=-2)  # (n,2,2)
    u_im = jnp.stack([jnp.stack([cos_im, sin_im], axis=-1),
                      jnp.stack([-sin_im, cos_im], axis=-1)], axis=-2)  # (n,2,2)

    # M = kron(U_0, ..., U_{n-1}) built on device in real/imag pairs.
    m_re, m_im = u_re[0], u_im[0]
    for k in range(1, num_qubit):
        a_re, a_im = m_re, m_im
        b_re, b_im = u_re[k], u_im[k]
        m_re = jnp.kron(a_re, b_re) - jnp.kron(a_im, b_im)
        m_im = jnp.kron(a_re, b_im) + jnp.kron(a_im, b_re)

    # conj(code1)^T
    c_re = code1_re.T
    c_im = -code1_im.T

    return overlap_sq_pallas(code0_re, code0_im, m_re, m_im, c_re, c_im)


# --------------------------- numpy reference -------------------------------

def make_so2_complex(params):
    """SpecialOrthogonal(2, dtype=complex128): a = p0 + i p1,
    U = [[cos a, sin a], [-sin a, cos a]]."""
    a = params[:, 0] + 1j * params[:, 1]
    ca, sa = np.cos(a), np.sin(a)
    u = np.empty((params.shape[0], 2, 2), dtype=np.complex128)
    u[:, 0, 0] = ca
    u[:, 0, 1] = sa
    u[:, 1, 0] = -sa
    u[:, 1, 1] = ca
    return u


def reference_loss(code0, code1, unitary):
    """Direct numpy transcription of the torch forward (complex128)."""
    n0 = code0.shape[0]
    num_qubit = unitary.shape[0]
    c = code0.copy()
    for ind0 in range(num_qubit):
        tmp0 = c.reshape(n0 * 2 ** ind0, 2, 2 ** (num_qubit - ind0 - 1))
        c = np.einsum('aic,ij->ajc', tmp0, unitary[ind0]).reshape(n0, -1)
    t = (c.conj() @ code1.T).reshape(-1)
    return n0 - np.vdot(t, t).real


# --------------------------------- demo ------------------------------------

if __name__ == "__main__":
    num_qubit = 8          # D = 2**8 = 256  ->  grid of 2 row-blocks (tm=128)
    dim = 2 ** num_qubit
    n0 = 2                 # two logical codewords

    key = jax.random.PRNGKey(0)
    k0, k1, k2, k3, k4 = jax.random.split(key, 5)

    def make_code(kr, ki):
        m = (np.asarray(jax.random.normal(kr, (dim, n0)), dtype=np.float64)
             + 1j * np.asarray(jax.random.normal(ki, (dim, n0)), dtype=np.float64))
        q, _ = np.linalg.qr(m)
        return np.ascontiguousarray(q[:, :n0].T)   # (n0, dim) orthonormal rows

    code0 = make_code(k0, k1)
    code1 = make_code(k2, k3)

    # deterministic manifold parameters -> num_qubit SO(2, C) matrices
    params = 0.1 * np.asarray(jax.random.normal(k4, (num_qubit, 2)),
                              dtype=np.float64)

    f32 = lambda a: jnp.asarray(np.ascontiguousarray(a), dtype=jnp.float32)
    t2 = qecc_equal_overlap_sq(f32(params),
                               f32(code0.real), f32(code0.imag),
                               f32(code1.real), f32(code1.imag))
    t2 = jax.block_until_ready(t2)

    # loss = N0 - ||T||_F^2, subtraction done in float64 outside the kernel
    # (avoids the f32 cancellation near convergence).
    loss = np.float64(n0) - np.float64(np.asarray(t2)[0, 0])

    ref = reference_loss(code0, code1, make_so2_complex(params))
    np.testing.assert_allclose(loss, ref, rtol=1e-3, atol=1e-3)

    print("KERNEL_OK")
</pallas_src>

<mosaic_0001>
module attributes {stable_mosaic.version = 11 : i64} {
  func.func @_overlap_sq_kernel(%arg0: i32, %arg1: memref<2x128xf32, #tpu.memory_space<vmem>>, %arg2: memref<2x128xf32, #tpu.memory_space<vmem>>, %arg3: memref<128x256xf32, #tpu.memory_space<vmem>>, %arg4: memref<128x256xf32, #tpu.memory_space<vmem>>, %arg5: memref<256x2xf32, #tpu.memory_space<vmem>>, %arg6: memref<256x2xf32, #tpu.memory_space<vmem>>, %arg7: memref<1x1xf32, #tpu.memory_space<smem>>, %arg8: memref<2x2xf32, #tpu.memory_space<vmem>>, %arg9: memref<2x2xf32, #tpu.memory_space<vmem>>) attributes {dimension_semantics = [#tpu.dimension_semantics<arbitrary>], iteration_bounds = array<i64: 2>, scalar_prefetch = 0 : i64, scratch_operands = 2 : i64, tpu.core_type = #tpu.core_type<tc>, window_params = [{transform_indices = @transform_0, window_bounds = array<i64: 2, 128>}, {transform_indices = @transform_1, window_bounds = array<i64: 2, 128>}, {transform_indices = @transform_2, window_bounds = array<i64: 128, 256>}, {transform_indices = @transform_3, window_bounds = array<i64: 128, 256>}, {pipeline_mode = #tpu.pipeline_mode<synchronous>, transform_indices = @transform_4, window_bounds = array<i64: 256, 2>}, {pipeline_mode = #tpu.pipeline_mode<synchronous>, transform_indices = @transform_5, window_bounds = array<i64: 256, 2>}, {transform_indices = @transform_6, window_bounds = array<i64: 1, 1>}]} {
    %c0_i32 = arith.constant 0 : i32
    %0 = arith.cmpi eq, %arg0, %c0_i32 : i32
    %1 = arith.extui %0 : i1 to i32
    %c0_i32_0 = arith.constant 0 : i32
    %2 = arith.cmpi ne, %1, %c0_i32_0 : i32
    scf.if %2 {
      %cst_28 = arith.constant 0.000000e+00 : f32
      %30 = vector.broadcast %cst_28 : f32 to vector<2x2xf32>
      %c0_29 = arith.constant 0 : index
      %c0_30 = arith.constant 0 : index
      %31 = vector.load %arg8[%c0_29, %c0_30] : memref<2x2xf32, #tpu.memory_space<vmem>>, vector<2x2xf32>
      tpu.vector_store %arg8[%c0_29, %c0_30], %30 {strides = array<i32>} : memref<2x2xf32, #tpu.memory_space<vmem>>, vector<2x2xf32>,
      %cst_31 = arith.constant 0.000000e+00 : f32
      %32 = vector.broadcast %cst_31 : f32 to vector<2x2xf32>
      %c0_32 = arith.constant 0 : index
      %c0_33 = arith.constant 0 : index
      %33 = vector.load %arg9[%c0_32, %c0_33] : memref<2x2xf32, #tpu.memory_space<vmem>>, vector<2x2xf32>
      tpu.vector_store %arg9[%c0_32, %c0_33], %32 {strides = array<i32>} : memref<2x2xf32, #tpu.memory_space<vmem>>, vector<2x2xf32>,
    } else {
    }
    %c0 = arith.constant 0 : index
    %c0_1 = arith.constant 0 : index
    %3 = vector.load %arg3[%c0, %c0_1] : memref<128x256xf32, #tpu.memory_space<vmem>>, vector<128x256xf32>
    %c0_2 = arith.constant 0 : index
    %c0_3 = arith.constant 0 : index
    %4 = vector.load %arg4[%c0_2, %c0_3] : memref<128x256xf32, #tpu.memory_space<vmem>>, vector<128x256xf32>
    %c0_4 = arith.constant 0 : index
    %c0_5 = arith.constant 0 : index
    %5 = vector.load %arg5[%c0_4, %c0_5] : memref<256x2xf32, #tpu.memory_space<vmem>>, vector<256x2xf32>
    %c0_6 = arith.constant 0 : index
    %c0_7 = arith.constant 0 : index
    %6 = vector.load %arg6[%c0_6, %c0_7] : memref<256x2xf32, #tpu.memory_space<vmem>>, vector<256x2xf32>
    %cst = arith.constant dense<0.000000e+00> : vector<128x2xf32>
    %7 = tpu.matmul %3, %5, %cst {dimension_numbers = #tpu.dot_dimension_numbers<[1], [0], [0], [1], [0, 0, 1, 1], [], []>} : vector<128x256xf32>, vector<256x2xf32>, vector<128x2xf32> -> vector<128x2xf32>
    %cst_8 = arith.constant dense<0.000000e+00> : vector<128x2xf32>
    %8 = tpu.matmul %4, %6, %cst_8 {dimension_numbers = #tpu.dot_dimension_numbers<[1], [0], [0], [1], [0, 0, 1, 1], [], []>} : vector<128x256xf32>, vector<256x2xf32>, vector<128x2xf32> -> vector<128x2xf32>
    %9 = arith.subf %7, %8 : vector<128x2xf32>
    %cst_9 = arith.constant dense<0.000000e+00> : vector<128x2xf32>
    %10 = tpu.matmul %3, %6, %cst_9 {dimension_numbers = #tpu.dot_dimension_numbers<[1], [0], [0], [1], [0, 0, 1, 1], [], []>} : vector<128x256xf32>, vector<256x2xf32>, vector<128x2xf32> -> vector<128x2xf32>
    %cst_10 = arith.constant dense<0.000000e+00> : vector<128x2xf32>
    %11 = tpu.matmul %4, %5, %cst_10 {dimension_numbers = #tpu.dot_dimension_numbers<[1], [0], [0], [1], [0, 0, 1, 1], [], []>} : vector<128x256xf32>, vector<256x2xf32>, vector<128x2xf32> -> vector<128x2xf32>
    %12 = arith.addf %10, %11 : vector<128x2xf32>
    %c0_11 = arith.constant 0 : index
    %c0_12 = arith.constant 0 : index
    %13 = vector.load %arg1[%c0_11, %c0_12] : memref<2x128xf32, #tpu.memory_space<vmem>>, vector<2x128xf32>
    %c0_13 = arith.constant 0 : index
    %c0_14 = arith.constant 0 : index
    %14 = vector.load %arg2[%c0_13, %c0_14] : memref<2x128xf32, #tpu.memory_space<vmem>>, vector<2x128xf32>
    %c0_15 = arith.constant 0 : index
    %c0_16 = arith.constant 0 : index
    %15 = vector.load %arg8[%c0_15, %c0_16] : memref<2x2xf32, #tpu.memory_space<vmem>>, vector<2x2xf32>
    %cst_17 = arith.constant dense<0.000000e+00> : vector<2x2xf32>
    %16 = tpu.matmul %13, %9, %cst_17 {dimension_numbers = #tpu.dot_dimension_numbers<[1], [0], [0], [1], [0, 0, 1, 1], [], []>} : vector<2x128xf32>, vector<128x2xf32>, vector<2x2xf32> -> vector<2x2xf32>
    %cst_18 = arith.constant dense<0.000000e+00> : vector<2x2xf32>
    %17 = tpu.matmul %14, %12, %cst_18 {dimension_numbers = #tpu.dot_dimension_numbers<[1], [0], [0], [1], [0, 0, 1, 1], [], []>} : vector<2x128xf32>, vector<128x2xf32>, vector<2x2xf32> -> vector<2x2xf32>
    %18 = arith.subf %16, %17 : vector<2x2xf32>
    %19 = arith.addf %15, %18 : vector<2x2xf32>
    %c0_19 = arith.constant 0 : index
    %c0_20 = arith.constant 0 : index
    %20 = vector.load %arg8[%c0_19, %c0_20] : memref<2x2xf32, #tpu.memory_space<vmem>>, vector<2x2xf32>
    tpu.vector_store %arg8[%c0_19, %c0_20], %19 {strides = array<i32>} : memref<2x2xf32, #tpu.memory_space<vmem>>, vector<2x2xf32>,
    %c0_21 = arith.constant 0 : index
    %c0_22 = arith.constant 0 : index
    %21 = vector.load %arg9[%c0_21, %c0_22] : memref<2x2xf32, #tpu.memory_space<vmem>>, vector<2x2xf32>
    %cst_23 = arith.constant dense<0.000000e+00> : vector<2x2xf32>
    %22 = tpu.matmul %13, %12, %cst_23 {dimension_numbers = #tpu.dot_dimension_numbers<[1], [0], [0], [1], [0, 0, 1, 1], [], []>} : vector<2x128xf32>, vector<128x2xf32>, vector<2x2xf32> -> vector<2x2xf32>
    %cst_24 = arith.constant dense<0.000000e+00> : vector<2x2xf32>
    %23 = tpu.matmul %14, %9, %cst_24 {dimension_numbers = #tpu.dot_dimension_numbers<[1], [0], [0], [1], [0, 0, 1, 1], [], []>} : vector<2x128xf32>, vector<128x2xf32>, vector<2x2xf32> -> vector<2x2xf32>
    %24 = arith.addf %22, %23 : vector<2x2xf32>
    %25 = arith.addf %21, %24 : vector<2x2xf32>
    %c0_25 = arith.constant 0 : index
    %c0_26 = arith.constant 0 : index
    %26 = vector.load %arg9[%c0_25, %c0_26] : memref<2x2xf32, #tpu.memory_space<vmem>>, vector<2x2xf32>
    tpu.vector_store %arg9[%c0_25, %c0_26], %25 {strides = array<i32>} : memref<2x2xf32, #tpu.memory_space<vmem>>, vector<2x2xf32>,
    %c1_i32 = arith.constant 1 : i32
    %27 = arith.cmpi eq, %arg0, %c1_i32 : i32
    %28 = arith.extui %27 : i1 to i32
    %c0_i32_27 = arith.constant 0 : i32
    %29 = arith.cmpi ne, %28, %c0_i32_27 : i32
    scf.if %29 {
      %c0_28 = arith.constant 0 : index
      %c0_29 = arith.constant 0 : index
      %30 = vector.load %arg8[%c0_28, %c0_29] : memref<2x2xf32, #tpu.memory_space<vmem>>, vector<2x2xf32>
      %c0_30 = arith.constant 0 : index
      %c0_31 = arith.constant 0 : index
      %31 = vector.load %arg9[%c0_30, %c0_31] : memref<2x2xf32, #tpu.memory_space<vmem>>, vector<2x2xf32>
      %32 = arith.mulf %30, %30 : vector<2x2xf32>
      %33 = arith.mulf %31, %31 : vector<2x2xf32>
      %34 = arith.addf %32, %33 : vector<2x2xf32>
      %35 = vector.shape_cast %34 : vector<2x2xf32> to vector<1x2x2xf32>
      %cst_32 = arith.constant dense<0.000000e+00> : vector<1xf32>
      %36 = vector.multi_reduction <add>, %35, %cst_32 [1, 2] : vector<1x2x2xf32> to vector<1xf32>
      %37 = vector.shape_cast %36 : vector<1xf32> to vector<1x1x1xf32>
      %38 = vector.extract %37[0, 0, 0] : f32 from vector<1x1x1xf32>
      %c0_33 = arith.constant 0 : index
      %c0_34 = arith.constant 0 : index
      %39 = memref.load %arg7[%c0_33, %c0_34] : memref<1x1xf32, #tpu.memory_space<smem>>
      memref.store %38, %arg7[%c0_33, %c0_34] : memref<1x1xf32, #tpu.memory_space<smem>>
    } else {
    }
    return
  }
  func.func @transform_0(%arg0: i32) -> (i32, i32) {
    %c0_i32 = arith.constant 0 : i32
    %c0_i32_0 = arith.constant 0 : i32
    return %c0_i32, %arg0 : i32, i32
  }
  func.func @transform_1(%arg0: i32) -> (i32, i32) {
    %c0_i32 = arith.constant 0 : i32
    %c0_i32_0 = arith.constant 0 : i32
    return %c0_i32, %arg0 : i32, i32
  }
  func.func @transform_2(%arg0: i32) -> (i32, i32) {
    %c0_i32 = arith.constant 0 : i32
    %c0_i32_0 = arith.constant 0 : i32
    return %arg0, %c0_i32 : i32, i32
  }
  func.func @transform_3(%arg0: i32) -> (i32, i32) {
    %c0_i32 = arith.constant 0 : i32
    %c0_i32_0 = arith.constant 0 : i32
    return %arg0, %c0_i32 : i32, i32
  }
  func.func @transform_4(%arg0: i32) -> (i32, i32) {
    %c0_i32 = arith.constant 0 : i32
    %c0_i32_0 = arith.constant 0 : i32
    %c0_i32_1 = arith.constant 0 : i32
    return %c0_i32, %c0_i32_0 : i32, i32
  }
  func.func @transform_5(%arg0: i32) -> (i32, i32) {
    %c0_i32 = arith.constant 0 : i32
    %c0_i32_0 = arith.constant 0 : i32
    %c0_i32_1 = arith.constant 0 : i32
    return %c0_i32, %c0_i32_0 : i32, i32
  }
  func.func @transform_6(%arg0: i32) -> (i32, i32) {
    %c0_i32 = arith.constant 0 : i32
    %c0_i32_0 = arith.constant 0 : i32
    %c0_i32_1 = arith.constant 0 : i32
    return %c0_i32, %c0_i32_0 : i32, i32
  }
}

</mosaic_0001>

<llo_original>
// kernel: neg.3
$region0: #{neg.3}
  #allocation0 [shape = 's32[1]{0}', space=sflag, size = 0x4, scoped, tag = 'scoped memory for neg.3']
  %s0 = inlined_call_operand.vmem [shape: f32[2,256], index: 0, kind: input, shape index: {}]
  %s1 = inlined_call_operand.vmem [shape: f32[2,256], index: 1, kind: output, shape index: {}]
  %v2 = vld [vmem:[%s0] sm:$0x3]
  %3 = xla_tuple %v2
  %4 = xla_tuple %3
  %v5 = vxor.u32 %v2, 2147483648
  %6 = xla_tuple %v5
  %7 = vst [vmem:[%s1] sm:$0x3] %v5
  %s8 = scalar_lea.vmem %s0, 2
  %v9 = vld [vmem:[%s8] sm:$0x3]
  %10 = xla_tuple %v9
  %11 = xla_tuple %10
  %v12 = vxor.u32 %v9, 2147483648
  %13 = xla_tuple %v12
  %s14 = scalar_lea.vmem %s1, 2
  %15 = vst [vmem:[%s14] sm:$0x3] %v12

// kernel: qecc_equal_overlap_sq.1
$region0: #{qecc_equal_overlap_sq.1}
  #allocation0 [shape = 'u32[]', space=smem, size = 0x4, offset = 0x4, fixed_abs, tag = 'smem constant byte address 0x4 - core index']
  #allocation1 [shape = 'u32[144,128]{1,0:T(1,128)}', space=vmem, size = 0x12000, scoped, tag = 'internal scratch']
  #allocation2 [shape = 'f32[2,2]{1,0:T(2,128)}', space=vmem, size = 0x400, scoped, tag = 'scratch operand']
  #allocation3 [shape = 'f32[2,2]{1,0:T(2,128)}', space=vmem, size = 0x400, scoped, tag = 'scratch operand']
  %s0 = inlined_call_operand.vmem [shape: f32[2,256], index: 0, kind: input, shape index: {}]
  %s1 = inlined_call_operand.vmem [shape: f32[2,256], index: 1, kind: input, shape index: {}]
  %s2 = inlined_call_operand.vmem [shape: f32[256,256], index: 2, kind: input, shape index: {}]
  %s3 = inlined_call_operand.vmem [shape: f32[256,256], index: 3, kind: input, shape index: {}]
  %s4 = inlined_call_operand.vmem [shape: f32[256,2], index: 4, kind: input, shape index: {}]
  %s5 = inlined_call_operand.vmem [shape: f32[256,2], index: 5, kind: input, shape index: {}]
  %s6 = inlined_call_operand.hbm [shape: f32[1,1], index: 6, kind: output, shape index: {}]
  %s7 = sld [smem:[#allocation0]]
  $region65: #{qecc_equal_overlap_sq.1} parent=0
    _
  %s9 = ssub.s32 1, %s7
  %s10 = scalar_select 0, %s9, %s7
  $region1: #{qecc_equal_overlap_sq.1} parent=0
    #allocation4 [shape = 'u8[512]{0}', space=smem, size = 0x200, scoped, tag = 'output window, operand 0, single buffered']
    #allocation5 [shape = 's32[2]{0}', space=sflag, size = 0x8, scoped, tag = 'scoped memory for qecc_equal_overlap_sq.1']
    %11 = vsyncpa [#allocation5], 0
    loop: start=0, step=1, limit=4
    $region2: #{qecc_equal_overlap_sq.1} parent=1 // loop_pre_header
      _
    $region3: #{qecc_equal_overlap_sq.1} parent=1 // loop_header
      %s13 = sphi 0, %s17
      %p14 = scmp.ge.s32.totalorder %s13, 4
      %s23 = sphi 0, %s25
      %s26 = sphi 0, %s23
      %s27 = sphi 0, %s26
      %s43 = sphi 0, %s27
      %s49 = sphi 0, %s51
      %s52 = sphi 0, %s49
      %s53 = sphi 0, %s52
      %s69 = sphi 0, %s53
      %s75 = sphi 0, %s77
      %s78 = sphi 0, %s75
      %s79 = sphi 0, %s78
      %s95 = sphi 0, %s79
      %s101 = sphi 0, %s103
      %s104 = sphi 0, %s101
      %s105 = sphi 0, %s104
      %s121 = sphi 0, %s105
      %s125 = sphi 0, %s125
      %s127 = sphi 0, %s125
      %s128 = sphi 0, %s127
      %s142 = sphi 0, %s128
      %s146 = sphi 0, %s146
      %s148 = sphi 0, %s146
      %s149 = sphi 0, %s148
      %s163 = sphi 0, %s149
      %s167 = sphi 0, %s167
      %s169 = sphi 0, %s167
      %s170 = sphi 0, %s169
      %s184 = sphi 0, %s170
    $region4: #{qecc_equal_overlap_sq.1} parent=1 // loop_header_branch
      %16 = sbr.rel (%p14) target = $region8
    $region5: #{qecc_equal_overlap_sq.1} parent=1 // loop_body
      %s18 = ssub.s32 %s13, 1
      %s19 = ssub.s32 %s13, 2
      %s20 = sadd.s32 %s13, 1
      %s21 = ssub.s32 %s13, %s20
      %p22 = scmp.eq.s32.totalorder %s21, 0
      %s24 = sadd.s32 %s23, 1
      %s25 = scalar_select %p22, %s23, %s24
      %p28 = pneg %p22
      %p29 = scmp.eq.s32.totalorder %s13, 1
      %p30 = por %p28, %p29
      %p31 = scmp.ne.s32.totalorder %s23, %s26
      %p32 = scmp.eq.s32.totalorder %s13, 0
      %p33 = por %p31, %p32
      %p34 = scmp.ne.s32.totalorder %s23, %s26
      %p35 = scmp.eq.s32.totalorder %s18, 1
      %p36 = por %p34, %p35
      %p37 = scmp.ne.s32.totalorder %s26, %s27
      %p38 = scmp.eq.s32.totalorder %s18, 0
      %p39 = por %p37, %p38
      %p40 = scmp.ne.s32.totalorder %s26, %s27
      %p41 = scmp.eq.s32.totalorder %s19, 1
      %p42 = por %p40, %p41
      %p44 = scmp.ne.s32.totalorder %s27, %s43
      %p45 = scmp.eq.s32.totalorder %s19, 0
      %p46 = por %p44, %p45
      %s47 = ssub.s32 %s13, %s20
      %p48 = scmp.eq.s32.totalorder %s47, 0
      %s50 = sadd.s32 %s49, 1
      %s51 = scalar_select %p48, %s49, %s50
      %p54 = pneg %p48
      %p55 = scmp.eq.s32.totalorder %s13, 1
      %p56 = por %p54, %p55
      %p57 = scmp.ne.s32.totalorder %s49, %s52
      %p58 = scmp.eq.s32.totalorder %s13, 0
      %p59 = por %p57, %p58
      %p60 = scmp.ne.s32.totalorder %s49, %s52
      %p61 = scmp.eq.s32.totalorder %s18, 1
      %p62 = por %p60, %p61
      %p63 = scmp.ne.s32.totalorder %s52, %s53
      %p64 = scmp.eq.s32.totalorder %s18, 0
      %p65 = por %p63, %p64
      %p66 = scmp.ne.s32.totalorder %s52, %s53
      %p67 = scmp.eq.s32.totalorder %s19, 1
      %p68 = por %p66, %p67
      %p70 = scmp.ne.s32.totalorder %s53, %s69
      %p71 = scmp.eq.s32.totalorder %s19, 0
      %p72 = por %p70, %p71
      %s73 = ssub.s32 %s13, %s20
      %p74 = scmp.eq.s32.totalorder %s73, 0
      %s76 = sadd.s32 %s75, 1
      %s77 = scalar_select %p74, %s75, %s76
      %p80 = pneg %p74
      %p81 = scmp.eq.s32.totalorder %s13, 1
      %p82 = por %p80, %p81
      %p83 = scmp.ne.s32.totalorder %s75, %s78
      %p84 = scmp.eq.s32.totalorder %s13, 0
      %p85 = por %p83, %p84
      %p86 = scmp.ne.s32.totalorder %s75, %s78
      %p87 = scmp.eq.s32.totalorder %s18, 1
      %p88 = por %p86, %p87
      %p89 = scmp.ne.s32.totalorder %s78, %s79
      %p90 = scmp.eq.s32.totalorder %s18, 0
      %p91 = por %p89, %p90
      %p92 = scmp.ne.s32.totalorder %s78, %s79
      %p93 = scmp.eq.s32.totalorder %s19, 1
      %p94 = por %p92, %p93
      %p96 = scmp.ne.s32.totalorder %s79, %s95
      %p97 = scmp.eq.s32.totalorder %s19, 0
      %p98 = por %p96, %p97
      %s99 = ssub.s32 %s13, %s20
      %p100 = scmp.eq.s32.totalorder %s99, 0
      %s102 = sadd.s32 %s101, 1
      %s103 = scalar_select %p100, %s101, %s102
      %p106 = pneg %p100
      %p107 = scmp.eq.s32.totalorder %s13, 1
      %p108 = por %p106, %p107
      %p109 = scmp.ne.s32.totalorder %s101, %s104
      %p110 = scmp.eq.s32.totalorder %s13, 0
      %p111 = por %p109, %p110
      %p112 = scmp.ne.s32.totalorder %s101, %s104
      %p113 = scmp.eq.s32.totalorder %s18, 1
      %p114 = por %p112, %p113
      %p115 = scmp.ne.s32.totalorder %s104, %s105
      %p116 = scmp.eq.s32.totalorder %s18, 0
      %p117 = por %p115, %p116
      %p118 = scmp.ne.s32.totalorder %s104, %s105
      %p119 = scmp.eq.s32.totalorder %s19, 1
      %p120 = por %p118, %p119
      %p122 = scmp.ne.s32.totalorder %s105, %s121
      %p123 = scmp.eq.s32.totalorder %s19, 0
      %p124 = por %p122, %p123
      %s126 = sadd.s32 %s125, 1
      %p129 = scmp.eq.s32.totalorder %s13, 1
      %p130 = scmp.ne.s32.totalorder %s125, %s127
      %p131 = scmp.eq.s32.totalorder %s13, 0
      %p132 = por %p130, %p131
      %p133 = scmp.ne.s32.totalorder %s125, %s127
      %p134 = scmp.eq.s32.totalorder %s18, 1
      %p135 = por %p133, %p134
      %p136 = scmp.ne.s32.totalorder %s127, %s128
      %p137 = scmp.eq.s32.totalorder %s18, 0
      %p138 = por %p136, %p137
      %p139 = scmp.ne.s32.totalorder %s127, %s128
      %p140 = scmp.eq.s32.totalorder %s19, 1
      %p141 = por %p139, %p140
      %p143 = scmp.ne.s32.totalorder %s128, %s142
      %p144 = scmp.eq.s32.totalorder %s19, 0
      %p145 = por %p143, %p144
      %s147 = sadd.s32 %s146, 1
      %p150 = scmp.eq.s32.totalorder %s13, 1
      %p151 = scmp.ne.s32.totalorder %s146, %s148
      %p152 = scmp.eq.s32.totalorder %s13, 0
      %p153 = por %p151, %p152
      %p154 = scmp.ne.s32.totalorder %s146, %s148
      %p155 = scmp.eq.s32.totalorder %s18, 1
      %p156 = por %p154, %p155
      %p157 = scmp.ne.s32.totalorder %s148, %s149
      %p158 = scmp.eq.s32.totalorder %s18, 0
      %p159 = por %p157, %p158
      %p160 = scmp.ne.s32.totalorder %s148, %s149
      %p161 = scmp.eq.s32.totalorder %s19, 1
      %p162 = por %p160, %p161
      %p164 = scmp.ne.s32.totalorder %s149, %s163
      %p165 = scmp.eq.s32.totalorder %s19, 0
      %p166 = por %p164, %p165
      %s168 = sadd.s32 %s167, 1
      %p171 = scmp.eq.s32.totalorder %s13, 1
      %p172 = scmp.ne.s32.totalorder %s167, %s169
      %p173 = scmp.eq.s32.totalorder %s13, 0
      %p174 = por %p172, %p173
      %p175 = scmp.ne.s32.totalorder %s167, %s169
      %p176 = scmp.eq.s32.totalorder %s18, 1
      %p177 = por %p175, %p176
      %p178 = scmp.ne.s32.totalorder %s169, %s170
      %p179 = scmp.eq.s32.totalorder %s18, 0
      %p180 = por %p178, %p179
      %p181 = scmp.ne.s32.totalorder %s169, %s170
      %p182 = scmp.eq.s32.totalorder %s19, 1
      %p183 = por %p181, %p182
      %p185 = scmp.ne.s32.totalorder %s170, %s184
      %p186 = scmp.eq.s32.totalorder %s19, 0
      %p187 = por %p185, %p186
      %p188 = scmp.le.s32.totalorder 1, %s13
      %p189 = scmp.lt.s32.totalorder %s13, 3
      %p190 = pnand %p188, %p189
      %p191 = pneg %p190
      // Predicated region
      $region9: #{qecc_equal_overlap_sq.1} parent=5 // pred_check
        _
      $region10: #{qecc_equal_overlap_sq.1} parent=5 // pred_check_branch
        %193 = sbr.rel (%p190) target = $region12
      $region11: #{qecc_equal_overlap_sq.1} parent=5 // pred_region
        %s194 = ssub.s32 %s13, 1
        // Predicated region
        $region13: #{qecc_equal_overlap_sq.1} parent=11 // pred_check
          %p195 = pneg %p138
        $region14: #{qecc_equal_overlap_sq.1} parent=11 // pred_check_branch
          %197 = sbr.rel (%p195) target = $region16
        $region15: #{qecc_equal_overlap_sq.1} parent=11 // pred_region
          _
        $region16: #{qecc_equal_overlap_sq.1} parent=11 // pred_fallthru
          _
        // Predicated region
        $region17: #{qecc_equal_overlap_sq.1} parent=11 // pred_check
          %p198 = pneg %p159
        $region18: #{qecc_equal_overlap_sq.1} parent=11 // pred_check_branch
          %200 = sbr.rel (%p198) target = $region20
        $region19: #{qecc_equal_overlap_sq.1} parent=11 // pred_region
          _
        $region20: #{qecc_equal_overlap_sq.1} parent=11 // pred_fallthru
          _
      $region12: #{qecc_equal_overlap_sq.1} parent=5 // pred_fallthru
        _
      %p201 = scmp.lt.s32.totalorder %s13, 2
      // Predicated region
      $region21: #{qecc_equal_overlap_sq.1} parent=5 // pred_check
        %p202 = pneg %p201
      $region22: #{qecc_equal_overlap_sq.1} parent=5 // pred_check_branch
        %204 = sbr.rel (%p202) target = $region24
      $region23: #{qecc_equal_overlap_sq.1} parent=5 // pred_region
        // Predicated region
        $region25: #{qecc_equal_overlap_sq.1} parent=23 // pred_check
          %p205 = pneg %p33
        $region26: #{qecc_equal_overlap_sq.1} parent=23 // pred_check_branch
          %207 = sbr.rel (%p205) target = $region28
        $region27: #{qecc_equal_overlap_sq.1} parent=23 // pred_region
          %p208 = scmp.lt.s32.totalorder %s13, 1
          %s209 = scalar_select %p208, %s13, 1
          %s210 = smul.addr %s209, 2
          %s211 = scalar_lea.vmem %s0, %s210
        $region28: #{qecc_equal_overlap_sq.1} parent=23 // pred_fallthru
          _
        // Predicated region
        $region29: #{qecc_equal_overlap_sq.1} parent=23 // pred_check
          %p212 = pneg %p59
        $region30: #{qecc_equal_overlap_sq.1} parent=23 // pred_check_branch
          %214 = sbr.rel (%p212) target = $region32
        $region31: #{qecc_equal_overlap_sq.1} parent=23 // pred_region
          %p215 = scmp.lt.s32.totalorder %s13, 1
          %s216 = scalar_select %p215, %s13, 1
          %s217 = smul.addr %s216, 2
          %s218 = scalar_lea.vmem %s1, %s217
        $region32: #{qecc_equal_overlap_sq.1} parent=23 // pred_fallthru
          _
        // Predicated region
        $region33: #{qecc_equal_overlap_sq.1} parent=23 // pred_check
          %p219 = pneg %p85
        $region34: #{qecc_equal_overlap_sq.1} parent=23 // pred_check_branch
          %221 = sbr.rel (%p219) target = $region36
        $region35: #{qecc_equal_overlap_sq.1} parent=23 // pred_region
          %s222 = smul.u32 16, %s13
          %p223 = scmp.lt.s32.totalorder %s222, 31
          %s224 = scalar_select %p223, %s222, 31
          %s225 = smul.addr %s224, 2
          %s226 = smul.addr %s225, 8
          %s227 = scalar_lea.vmem %s2, %s226
          %s228 = smul.u32 16, %s13
        $region36: #{qecc_equal_overlap_sq.1} parent=23 // pred_fallthru
          _
        // Predicated region
        $region37: #{qecc_equal_overlap_sq.1} parent=23 // pred_check
          %p229 = pneg %p111
        $region38: #{qecc_equal_overlap_sq.1} parent=23 // pred_check_branch
          %231 = sbr.rel (%p229) target = $region40
        $region39: #{qecc_equal_overlap_sq.1} parent=23 // pred_region
          %s232 = smul.u32 16, %s13
          %p233 = scmp.lt.s32.totalorder %s232, 31
          %s234 = scalar_select %p233, %s232, 31
          %s235 = smul.addr %s234, 2
          %s236 = smul.addr %s235, 8
          %s237 = scalar_lea.vmem %s3, %s236
          %s238 = smul.u32 16, %s13
        $region40: #{qecc_equal_overlap_sq.1} parent=23 // pred_fallthru
          _
      $region24: #{qecc_equal_overlap_sq.1} parent=5 // pred_fallthru
        _
      %p239 = scmp.le.s32.totalorder 1, %s13
      %p240 = scmp.lt.s32.totalorder %s13, 3
      %p241 = pnand %p239, %p240
      %p242 = pneg %p241
      // Predicated region
      $region41: #{qecc_equal_overlap_sq.1} parent=5 // pred_check
        _
      $region42: #{qecc_equal_overlap_sq.1} parent=5 // pred_check_branch
        %244 = sbr.rel (%p241) target = $region44
      $region43: #{qecc_equal_overlap_sq.1} parent=5 // pred_region
        %s245 = ssub.s32 %s13, 1
        %p246 = scmp.lt.s32.totalorder %s18, 1
        %s247 = scalar_select %p246, %s18, 1
        %s248 = smul.addr %s247, 2
        %s249 = scalar_lea.vmem %s0, %s248
        %p250 = pneg %p39
        %p251 = pneg %p36
        %p252 = scmp.lt.s32.totalorder %s18, 1
        %s253 = scalar_select %p252, %s18, 1
        %s254 = smul.addr %s253, 2
        %s255 = scalar_lea.vmem %s1, %s254
        %p256 = pneg %p65
        %p257 = pneg %p62
        %s258 = smul.u32 16, %s18
        %p259 = scmp.lt.s32.totalorder %s258, 31
        %s260 = scalar_select %p259, %s258, 31
        %s261 = smul.addr %s260, 2
        %s262 = smul.addr %s261, 8
        %s263 = scalar_lea.vmem %s2, %s262
        %p264 = pneg %p91
        %p265 = pneg %p88
        %s266 = smul.u32 16, %s18
        %p267 = scmp.lt.s32.totalorder %s266, 31
        %s268 = scalar_select %p267, %s266, 31
        %s269 = smul.addr %s268, 2
        %s270 = smul.addr %s269, 8
        %s271 = scalar_lea.vmem %s3, %s270
        %p272 = pneg %p117
        %p273 = pneg %p114
        %p274 = pneg %p138
        %p275 = pneg %p135
        %p276 = pneg %p159
        %p277 = pneg %p156
        %p278 = pneg %p180
        %p279 = pneg %p177
        %p280 = scmp.lt.s32.totalorder %s18, 1
        %s281 = scalar_select %p280, %s18, 1
        %s282 = smul.addr %s281, 2
        %s283 = scalar_lea.vmem %s0, %s282
        %p284 = scmp.lt.s32.totalorder %s18, 1
        %s285 = scalar_select %p284, %s18, 1
        %s286 = smul.addr %s285, 2
        %s287 = scalar_lea.vmem %s1, %s286
        %s288 = smul.u32 16, %s18
        %p289 = scmp.lt.s32.totalorder %s288, 31
        %s290 = scalar_select %p289, %s288, 31
        %s291 = smul.addr %s290, 2
        %s292 = smul.addr %s291, 8
        %s293 = scalar_lea.vmem %s2, %s292
        %s294 = smul.u32 16, %s18
        %s295 = smul.u32 16, %s18
        %p296 = scmp.lt.s32.totalorder %s295, 31
        %s297 = scalar_select %p296, %s295, 31
        %s298 = smul.addr %s297, 2
        %s299 = smul.addr %s298, 8
        %s300 = scalar_lea.vmem %s3, %s299
        %s301 = smul.u32 16, %s18
        %p302 = scmp.eq.s32.totalorder %s18, 0
        // Predicated region
        $region45: #{qecc_equal_overlap_sq.1} parent=43 // pred_check
          %p303 = pneg %p302
        $region46: #{qecc_equal_overlap_sq.1} parent=43 // pred_check_branch
          %305 = sbr.rel (%p303) target = $region48
        $region47: #{qecc_equal_overlap_sq.1} parent=43 // pred_region
          %vm306 = vcmask 9216
          %307 = vst.msk [vmem:[#allocation2] sm:$0x3] %vm306, 0.0
          %308 = vst.msk [vmem:[#allocation3] sm:$0x3] %vm306, 0.0
        $region48: #{qecc_equal_overlap_sq.1} parent=43 // pred_fallthru
          _
        %v309 = vld [vmem:[%s293] sm:$0xff]
        %v310 = vld [vmem:[%s293 + $0x8] sm:$0xff]
        %v311 = vld [vmem:[%s293 + $0x10] sm:$0xff]
        %v312 = vld [vmem:[%s293 + $0x18] sm:$0xff]
        %v313 = vld [vmem:[%s293 + $0x20] sm:$0xff]
        %v314 = vld [vmem:[%s293 + $0x28] sm:$0xff]
        %v315 = vld [vmem:[%s293 + $0x30] sm:$0xff]
        %v316 = vld [vmem:[%s293 + $0x38] sm:$0xff]
        %v317 = vld [vmem:[%s293 + $0x40] sm:$0xff]
        %v318 = vld [vmem:[%s293 + $0x48] sm:$0xff]
        %v319 = vld [vmem:[%s293 + $0x50] sm:$0xff]
        %v320 = vld [vmem:[%s293 + $0x58] sm:$0xff]
        %v321 = vld [vmem:[%s293 + $0x60] sm:$0xff]
        %v322 = vld [vmem:[%s293 + $0x68] sm:$0xff]
        %v323 = vld [vmem:[%s293 + $0x70] sm:$0xff]
        %v324 = vld [vmem:[%s293 + $0x78] sm:$0xff]
        %v325 = vld [vmem:[%s293 + $0x80] sm:$0xff]
        %v326 = vld [vmem:[%s293 + $0x88] sm:$0xff]
        %v327 = vld [vmem:[%s293 + $0x90] sm:$0xff]
        %v328 = vld [vmem:[%s293 + $0x98] sm:$0xff]
        %v329 = vld [vmem:[%s293 + $0xa0] sm:$0xff]
        %v330 = vld [vmem:[%s293 + $0xa8] sm:$0xff]
        %v331 = vld [vmem:[%s293 + $0xb0] sm:$0xff]
        %v332 = vld [vmem:[%s293 + $0xb8] sm:$0xff]
        %v333 = vld [vmem:[%s293 + $0xc0] sm:$0xff]
        %v334 = vld [vmem:[%s293 + $0xc8] sm:$0xff]
        %v335 = vld [vmem:[%s293 + $0xd0] sm:$0xff]
        %v336 = vld [vmem:[%s293 + $0xd8] sm:$0xff]
        %v337 = vld [vmem:[%s293 + $0xe0] sm:$0xff]
        %v338 = vld [vmem:[%s293 + $0xe8] sm:$0xff]
        %v339 = vld [vmem:[%s293 + $0xf0] sm:$0xff]
        %v340 = vld [vmem:[%s293 + $0xf8] sm:$0xff]
        %v341 = vld [vmem:[%s300] sm:$0xff]
        %v342 = vld [vmem:[%s300 + $0x8] sm:$0xff]
        %v343 = vld [vmem:[%s300 + $0x10] sm:$0xff]
        %v344 = vld [vmem:[%s300 + $0x18] sm:$0xff]
        %v345 = vld [vmem:[%s300 + $0x20] sm:$0xff]
        %v346 = vld [vmem:[%s300 + $0x28] sm:$0xff]
        %v347 = vld [vmem:[%s300 + $0x30] sm:$0xff]
        %v348 = vld [vmem:[%s300 + $0x38] sm:$0xff]
        %v349 = vld [vmem:[%s300 + $0x40] sm:$0xff]
        %v350 = vld [vmem:[%s300 + $0x48] sm:$0xff]
        %v351 = vld [vmem:[%s300 + $0x50] sm:$0xff]
        %v352 = vld [vmem:[%s300 + $0x58] sm:$0xff]
        %v353 = vld [vmem:[%s300 + $0x60] sm:$0xff]
        %v354 = vld [vmem:[%s300 + $0x68] sm:$0xff]
        %v355 = vld [vmem:[%s300 + $0x70] sm:$0xff]
        %v356 = vld [vmem:[%s300 + $0x78] sm:$0xff]
        %v357 = vld [vmem:[%s300 + $0x80] sm:$0xff]
        %v358 = vld [vmem:[%s300 + $0x88] sm:$0xff]
        %v359 = vld [vmem:[%s300 + $0x90] sm:$0xff]
        %v360 = vld [vmem:[%s300 + $0x98] sm:$0xff]
        %v361 = vld [vmem:[%s300 + $0xa0] sm:$0xff]
        %v362 = vld [vmem:[%s300 + $0xa8] sm:$0xff]
        %v363 = vld [vmem:[%s300 + $0xb0] sm:$0xff]
        %v364 = vld [vmem:[%s300 + $0xb8] sm:$0xff]
        %v365 = vld [vmem:[%s300 + $0xc0] sm:$0xff]
        %v366 = vld [vmem:[%s300 + $0xc8] sm:$0xff]
        %v367 = vld [vmem:[%s300 + $0xd0] sm:$0xff]
        %v368 = vld [vmem:[%s300 + $0xd8] sm:$0xff]
        %v369 = vld [vmem:[%s300 + $0xe0] sm:$0xff]
        %v370 = vld [vmem:[%s300 + $0xe8] sm:$0xff]
        %v371 = vld [vmem:[%s300 + $0xf0] sm:$0xff]
        %v372 = vld [vmem:[%s300 + $0xf8] sm:$0xff]
        %v373 = vld [vmem:[%s4] sm:$0xff]
        %v374 = vld [vmem:[%s4 + $0x8] sm:$0xff]
        %v375 = vld [vmem:[%s4 + $0x10] sm:$0xff]
        %v376 = vld [vmem:[%s4 + $0x18] sm:$0xff]
        %v377 = vld [vmem:[%s4 + $0x20] sm:$0xff]
        %v378 = vld [vmem:[%s4 + $0x28] sm:$0xff]
        %v379 = vld [vmem:[%s4 + $0x30] sm:$0xff]
        %v380 = vld [vmem:[%s4 + $0x38] sm:$0xff]
        %v381 = vld [vmem:[%s4 + $0x40] sm:$0xff]
        %v382 = vld [vmem:[%s4 + $0x48] sm:$0xff]
        %v383 = vld [vmem:[%s4 + $0x50] sm:$0xff]
        %v384 = vld [vmem:[%s4 + $0x58] sm:$0xff]
        %v385 = vld [vmem:[%s4 + $0x60] sm:$0xff]
        %v386 = vld [vmem:[%s4 + $0x68] sm:$0xff]
        %v387 = vld [vmem:[%s4 + $0x70] sm:$0xff]
        %v388 = vld [vmem:[%s4 + $0x78] sm:$0xff]
        %v389 = vld [vmem:[%s4 + $0x80] sm:$0xff]
        %v390 = vld [vmem:[%s4 + $0x88] sm:$0xff]
        %v391 = vld [vmem:[%s4 + $0x90] sm:$0xff]
        %v392 = vld [vmem:[%s4 + $0x98] sm:$0xff]
        %v393 = vld [vmem:[%s4 + $0xa0] sm:$0xff]
        %v394 = vld [vmem:[%s4 + $0xa8] sm:$0xff]
        %v395 = vld [vmem:[%s4 + $0xb0] sm:$0xff]
        %v396 = vld [vmem:[%s4 + $0xb8] sm:$0xff]
        %v397 = vld [vmem:[%s4 + $0xc0] sm:$0xff]
        %v398 = vld [vmem:[%s4 + $0xc8] sm:$0xff]
        %v399 = vld [vmem:[%s4 + $0xd0] sm:$0xff]
        %v400 = vld [vmem:[%s4 + $0xd8] sm:$0xff]
        %v401 = vld [vmem:[%s4 + $0xe0] sm:$0xff]
        %v402 = vld [vmem:[%s4 + $0xe8] sm:$0xff]
        %v403 = vld [vmem:[%s4 + $0xf0] sm:$0xff]
        %v404 = vld [vmem:[%s4 + $0xf8] sm:$0xff]
        %v405 = vld [vmem:[%s5] sm:$0xff]
        %v406 = vld [vmem:[%s5 + $0x8] sm:$0xff]
        %v407 = vld [vmem:[%s5 + $0x10] sm:$0xff]
        %v408 = vld [vmem:[%s5 + $0x18] sm:$0xff]
        %v409 = vld [vmem:[%s5 + $0x20] sm:$0xff]
        %v410 = vld [vmem:[%s5 + $0x28] sm:$0xff]
        %v411 = vld [vmem:[%s5 + $0x30] sm:$0xff]
        %v412 = vld [vmem:[%s5 + $0x38] sm:$0xff]
        %v413 = vld [vmem:[%s5 + $0x40] sm:$0xff]
        %v414 = vld [vmem:[%s5 + $0x48] sm:$0xff]
        %v415 = vld [vmem:[%s5 + $0x50] sm:$0xff]
        %v416 = vld [vmem:[%s5 + $0x58] sm:$0xff]
        %v417 = vld [vmem:[%s5 + $0x60] sm:$0xff]
        %v418 = vld [vmem:[%s5 + $0x68] sm:$0xff]
        %v419 = vld [vmem:[%s5 + $0x70] sm:$0xff]
        %v420 = vld [vmem:[%s5 + $0x78] sm:$0xff]
        %v421 = vld [vmem:[%s5 + $0x80] sm:$0xff]
        %v422 = vld [vmem:[%s5 + $0x88] sm:$0xff]
        %v423 = vld [vmem:[%s5 + $0x90] sm:$0xff]
        %v424 = vld [vmem:[%s5 + $0x98] sm:$0xff]
        %v425 = vld [vmem:[%s5 + $0xa0] sm:$0xff]
        %v426 = vld [vmem:[%s5 + $0xa8] sm:$0xff]
        %v427 = vld [vmem:[%s5 + $0xb0] sm:$0xff]
        %v428 = vld [vmem:[%s5 + $0xb8] sm:$0xff]
        %v429 = vld [vmem:[%s5 + $0xc0] sm:$0xff]
        %v430 = vld [vmem:[%s5 + $0xc8] sm:$0xff]
        %v431 = vld [vmem:[%s5 + $0xd0] sm:$0xff]
        %v432 = vld [vmem:[%s5 + $0xd8] sm:$0xff]
        %v433 = vld [vmem:[%s5 + $0xe0] sm:$0xff]
        %v434 = vld [vmem:[%s5 + $0xe8] sm:$0xff]
        %v435 = vld [vmem:[%s5 + $0xf0] sm:$0xff]
        %v436 = vld [vmem:[%s5 + $0xf8] sm:$0xff]
        %437 = vmatprep.subr.mxu0 0.0
        %438 = vmatpush1.msra.mxu0 %v373
        %439 = vmatprep.subr.mxu0 0.0
        %440 = vmatpush1.msra.mxu0 %v374
        %441 = vmatprep.subr.mxu0 0.0
        %442 = vmatpush1.msra.mxu0 %v375
        %443 = vmatprep.subr.mxu0 0.0
        %444 = vmatpush1.msra.mxu0 %v376
        %445 = vmatprep.subr.mxu0 0.0
        %446 = vmatpush1.msra.mxu0 %v377
        %447 = vmatprep.subr.mxu0 0.0
        %448 = vmatpush1.msra.mxu0 %v378
        %449 = vmatprep.subr.mxu0 0.0
        %450 = vmatpush1.msra.mxu0 %v379
        %451 = vmatprep.subr.mxu0 0.0
        %452 = vmatpush1.msra.mxu0 %v380
        %453 = vmatprep.subr.mxu0 0.0
        %454 = vmatpush1.msra.mxu0 %v381
        %455 = vmatprep.subr.mxu0 0.0
        %456 = vmatpush1.msra.mxu0 %v382
        %457 = vmatprep.subr.mxu0 0.0
        %458 = vmatpush1.msra.mxu0 %v383
        %459 = vmatprep.subr.mxu0 0.0
        %460 = vmatpush1.msra.mxu0 %v384
        %461 = vmatprep.subr.mxu0 0.0
        %462 = vmatpush1.msra.mxu0 %v385
        %463 = vmatprep.subr.mxu0 0.0
        %464 = vmatpush1.msra.mxu0 %v386
        %465 = vmatprep.subr.mxu0 0.0
        %466 = vmatpush1.msra.mxu0 %v387
        %467 = vmatprep.subr.mxu0 0.0
        %468 = vmatpush1.msra.mxu0 %v388
        %469 = vmatprep.subr.mxu0 0.0
        %470 = vmatpush1.msra.mxu0 %v389
        %471 = vmatprep.subr.mxu0 0.0
        %472 = vmatpush1.msra.mxu0 %v390
        %473 = vmatprep.subr.mxu0 0.0
        %474 = vmatpush1.msra.mxu0 %v391
        %475 = vmatprep.subr.mxu0 0.0
        %476 = vmatpush1.msra.mxu0 %v392
        %477 = vmatprep.subr.mxu0 0.0
        %478 = vmatpush1.msra.mxu0 %v393
        %479 = vmatprep.subr.mxu0 0.0
        %480 = vmatpush1.msra.mxu0 %v394
        %481 = vmatprep.subr.mxu0 0.0
        %482 = vmatpush1.msra.mxu0 %v395
        %483 = vmatprep.subr.mxu0 0.0
        %484 = vmatpush1.msra.mxu0 %v396
        %485 = vmatprep.subr.mxu0 0.0
        %486 = vmatpush1.msra.mxu0 %v397
        %487 = vmatprep.subr.mxu0 0.0
        %488 = vmatpush1.msra.mxu0 %v398
        %489 = vmatprep.subr.mxu0 0.0
        %490 = vmatpush1.msra.mxu0 %v399
        %491 = vmatprep.subr.mxu0 0.0
        %492 = vmatpush1.msra.mxu0 %v400
        %493 = vmatprep.subr.mxu0 0.0
        %494 = vmatpush1.msra.mxu0 %v401
        %495 = vmatprep.subr.mxu0 0.0
        %496 = vmatpush1.msra.mxu0 %v402
        %497 = vmatprep.subr.mxu0 0.0
        %498 = vmatpush1.msra.mxu0 %v403
        %499 = vmatprep.subr.mxu0 0.0
        %500 = vmatpush1.msra.mxu0 %v404
        %501 = vmatprep.mubr.f32.mxu0 %v310
        %502 = vmatmul.mubr.f32.gmra.mrb[0].mxu0 %v309
        %v503 = vpop.f32.mrb[0].mxu0
        %v504 = vadd.f32 0.0, %v503
        %v505 = vpop.f32.mrb[0].mxu0
        %506 = vmatprep.mubr.f32.mxu0 %v312
        %507 = vmatmul.mubr.f32.gmra.mrb[0].mxu0 %v311
        %v508 = vpop.f32.mrb[0].mxu0
        %v509 = vadd.f32 0.0, %v508
        %v510 = vpop.f32.mrb[0].mxu0
        %511 = vmatprep.mubr.f32.mxu0 %v314
        %512 = vmatmul.mubr.f32.gmra.mrb[0].mxu0 %v313
        %v513 = vpop.f32.mrb[0].mxu0
        %v514 = vadd.f32 0.0, %v513
        %v515 = vpop.f32.mrb[0].mxu0
        %516 = vmatprep.mubr.f32.mxu0 %v316
        %517 = vmatmul.mubr.f32.gmra.mrb[0].mxu0 %v315
        %v518 = vpop.f32.mrb[0].mxu0
        %v519 = vadd.f32 0.0, %v518
        %v520 = vpop.f32.mrb[0].mxu0
        %521 = vmatprep.mubr.f32.mxu0 %v318
        %522 = vmatmul.mubr.f32.gmra.mrb[0].mxu0 %v317
        %v523 = vpop.f32.mrb[0].mxu0
        %v524 = vadd.f32 0.0, %v523
        %v525 = vpop.f32.mrb[0].mxu0
        %526 = vmatprep.mubr.f32.mxu0 %v320
        %527 = vmatmul.mubr.f32.gmra.mrb[0].mxu0 %v319
        %v528 = vpop.f32.mrb[0].mxu0
        %v529 = vadd.f32 0.0, %v528
        %v530 = vpop.f32.mrb[0].mxu0
        %531 = vmatprep.mubr.f32.mxu0 %v322
        %532 = vmatmul.mubr.f32.gmra.mrb[0].mxu0 %v321
        %v533 = vpop.f32.mrb[0].mxu0
        %v534 = vadd.f32 0.0, %v533
        %v535 = vpop.f32.mrb[0].mxu0
        %536 = vmatprep.mubr.f32.mxu0 %v324
        %537 = vmatmul.mubr.f32.gmra.mrb[0].mxu0 %v323
        %v538 = vpop.f32.mrb[0].mxu0
        %v539 = vadd.f32 0.0, %v538
        %v540 = vpop.f32.mrb[0].mxu0
        %541 = vmatprep.mubr.f32.mxu0 %v326
        %542 = vmatmul.mubr.f32.gmra.mrb[0].mxu0 %v325
        %v543 = vpop.f32.mrb[0].mxu0
        %v544 = vadd.f32 0.0, %v543
        %v545 = vpop.f32.mrb[0].mxu0
        %546 = vmatprep.mubr.f32.mxu0 %v328
        %547 = vmatmul.mubr.f32.gmra.mrb[0].mxu0 %v327
        %v548 = vpop.f32.mrb[0].mxu0
        %v549 = vadd.f32 0.0, %v548
        %v550 = vpop.f32.mrb[0].mxu0
        %551 = vmatprep.mubr.f32.mxu0 %v330
        %552 = vmatmul.mubr.f32.gmra.mrb[0].mxu0 %v329
        %v553 = vpop.f32.mrb[0].mxu0
        %v554 = vadd.f32 0.0, %v553
        %v555 = vpop.f32.mrb[0].mxu0
        %556 = vmatprep.mubr.f32.mxu0 %v332
        %557 = vmatmul.mubr.f32.gmra.mrb[0].mxu0 %v331
        %v558 = vpop.f32.mrb[0].mxu0
        %v559 = vadd.f32 0.0, %v558
        %v560 = vpop.f32.mrb[0].mxu0
        %561 = vmatprep.mubr.f32.mxu0 %v334
        %562 = vmatmul.mubr.f32.gmra.mrb[0].mxu0 %v333
        %v563 = vpop.f32.mrb[0].mxu0
        %v564 = vadd.f32 0.0, %v563
        %v565 = vpop.f32.mrb[0].mxu0
        %566 = vmatprep.mubr.f32.mxu0 %v336
        %567 = vmatmul.mubr.f32.gmra.mrb[0].mxu0 %v335
        %v568 = vpop.f32.mrb[0].mxu0
        %v569 = vadd.f32 0.0, %v568
        %v570 = vpop.f32.mrb[0].mxu0
        %571 = vmatprep.mubr.f32.mxu0 %v338
        %572 = vmatmul.mubr.f32.gmra.mrb[0].mxu0 %v337
        %v573 = vpop.f32.mrb[0].mxu0
        %v574 = vadd.f32 0.0, %v573
        %v575 = vpop.f32.mrb[0].mxu0
        %576 = vmatprep.mubr.f32.mxu0 %v340
        %577 = vmatmul.mubr.f32.gmra.mrb[0].mxu0 %v339
        %v578 = vpop.f32.mrb[0].mxu0
        %v579 = vadd.f32 0.0, %v578
        %v580 = vpop.f32.mrb[0].mxu0
        %581 = vdwg.mxu0
        %582 = vmatprep.subr.mxu0 0.0
        %583 = vmatpush1.msra.mxu0 %v405
        %584 = vmatprep.subr.mxu0 0.0
        %585 = vmatpush1.msra.mxu0 %v406
        %586 = vmatprep.subr.mxu0 0.0
        %587 = vmatpush1.msra.mxu0 %v407
        %588 = vmatprep.subr.mxu0 0.0
        %589 = vmatpush1.msra.mxu0 %v408
        %590 = vmatprep.subr.mxu0 0.0
        %591 = vmatpush1.msra.mxu0 %v409
        %592 = vmatprep.subr.mxu0 0.0
        %593 = vmatpush1.msra.mxu0 %v410
        %594 = vmatprep.subr.mxu0 0.0
        %595 = vmatpush1.msra.mxu0 %v411
        %596 = vmatprep.subr.mxu0 0.0
        %597 = vmatpush1.msra.mxu0 %v412
        %598 = vmatprep.subr.mxu0 0.0
        %599 = vmatpush1.msra.mxu0 %v413
        %600 = vmatprep.subr.mxu0 0.0
        %601 = vmatpush1.msra.mxu0 %v414
        %602 = vmatprep.subr.mxu0 0.0
        %603 = vmatpush1.msra.mxu0 %v415
        %604 = vmatprep.subr.mxu0 0.0
        %605 = vmatpush1.msra.mxu0 %v416
        %606 = vmatprep.subr.mxu0 0.0
        %607 = vmatpush1.msra.mxu0 %v417
        %608 = vmatprep.subr.mxu0 0.0
        %609 = vmatpush1.msra.mxu0 %v418
        %610 = vmatprep.subr.mxu0 0.0
        %611 = vmatpush1.msra.mxu0 %v419
        %612 = vmatprep.subr.mxu0 0.0
        %613 = vmatpush1.msra.mxu0 %v420
        %614 = vmatprep.subr.mxu0 0.0
        %615 = vmatpush1.msra.mxu0 %v421
        %616 = vmatprep.subr.mxu0 0.0
        %617 = vmatpush1.msra.mxu0 %v422
        %618 = vmatprep.subr.mxu0 0.0
        %619 = vmatpush1.msra.mxu0 %v423
        %620 = vmatprep.subr.mxu0 0.0
        %621 = vmatpush1.msra.mxu0 %v424
        %622 = vmatprep.subr.mxu0 0.0
        %623 = vmatpush1.msra.mxu0 %v425
        %624 = vmatprep.subr.mxu0 0.0
        %625 = vmatpush1.msra.mxu0 %v426
        %626 = vmatprep.subr.mxu0 0.0
        %627 = vmatpush1.msra.mxu0 %v427
        %628 = vmatprep.subr.mxu0 0.0
        %629 = vmatpush1.msra.mxu0 %v428
        %630 = vmatprep.subr.mxu0 0.0
        %631 = vmatpush1.msra.mxu0 %v429
        %632 = vmatprep.subr.mxu0 0.0
        %633 = vmatpush1.msra.mxu0 %v430
        %634 = vmatprep.subr.mxu0 0.0
        %635 = vmatpush1.msra.mxu0 %v431
        %636 = vmatprep.subr.mxu0 0.0
        %637 = vmatpush1.msra.mxu0 %v432
        %638 = vmatprep.subr.mxu0 0.0
        %639 = vmatpush1.msra.mxu0 %v433
        %640 = vmatprep.subr.mxu0 0.0
        %641 = vmatpush1.msra.mxu0 %v434
        %642 = vmatprep.subr.mxu0 0.0
        %643 = vmatpush1.msra.mxu0 %v435
        %644 = vmatprep.subr.mxu0 0.0
        %645 = vmatpush1.msra.mxu0 %v436
        %646 = vmatprep.mubr.f32.mxu0 %v342
        %647 = vmatmul.mubr.f32.gmra.mrb[0].mxu0 %v341
        %v648 = vpop.f32.mrb[0].mxu0
        %v649 = vadd.f32 0.0, %v648
        %v650 = vpop.f32.mrb[0].mxu0
        %651 = vmatprep.mubr.f32.mxu0 %v344
        %652 = vmatmul.mubr.f32.gmra.mrb[0].mxu0 %v343
        %v653 = vpop.f32.mrb[0].mxu0
        %v654 = vadd.f32 0.0, %v653
        %v655 = vpop.f32.mrb[0].mxu0
        %656 = vmatprep.mubr.f32.mxu0 %v346
        %657 = vmatmul.mubr.f32.gmra.mrb[0].mxu0 %v345
        %v658 = vpop.f32.mrb[0].mxu0
        %v659 = vadd.f32 0.0, %v658
        %v660 = vpop.f32.mrb[0].mxu0
        %661 = vmatprep.mubr.f32.mxu0 %v348
        %662 = vmatmul.mubr.f32.gmra.mrb[0].mxu0 %v347
        %v663 = vpop.f32.mrb[0].mxu0
        %v664 = vadd.f32 0.0, %v663
        %v665 = vpop.f32.mrb[0].mxu0
        %666 = vmatprep.mubr.f32.mxu0 %v350
        %667 = vmatmul.mubr.f32.gmra.mrb[0].mxu0 %v349
        %v668 = vpop.f32.mrb[0].mxu0
        %v669 = vadd.f32 0.0, %v668
        %v670 = vpop.f32.mrb[0].mxu0
        %671 = vmatprep.mubr.f32.mxu0 %v352
        %672 = vmatmul.mubr.f32.gmra.mrb[0].mxu0 %v351
        %v673 = vpop.f32.mrb[0].mxu0
        %v674 = vadd.f32 0.0, %v673
        %v675 = vpop.f32.mrb[0].mxu0
        %676 = vmatprep.mubr.f32.mxu0 %v354
        %677 = vmatmul.mubr.f32.gmra.mrb[0].mxu0 %v353
        %v678 = vpop.f32.mrb[0].mxu0
        %v679 = vadd.f32 0.0, %v678
        %v680 = vpop.f32.mrb[0].mxu0
        %681 = vmatprep.mubr.f32.mxu0 %v356
        %682 = vmatmul.mubr.f32.gmra.mrb[0].mxu0 %v355
        %v683 = vpop.f32.mrb[0].mxu0
        %v684 = vadd.f32 0.0, %v683
        %v685 = vpop.f32.mrb[0].mxu0
        %686 = vmatprep.mubr.f32.mxu0 %v358
        %687 = vmatmul.mubr.f32.gmra.mrb[0].mxu0 %v357
        %v688 = vpop.f32.mrb[0].mxu0
        %v689 = vadd.f32 0.0, %v688
        %v690 = vpop.f32.mrb[0].mxu0
        %691 = vmatprep.mubr.f32.mxu0 %v360
        %692 = vmatmul.mubr.f32.gmra.mrb[0].mxu0 %v359
        %v693 = vpop.f32.mrb[0].mxu0
        %v694 = vadd.f32 0.0, %v693
        %v695 = vpop.f32.mrb[0].mxu0
        %696 = vmatprep.mubr.f32.mxu0 %v362
        %697 = vmatmul.mubr.f32.gmra.mrb[0].mxu0 %v361
        %v698 = vpop.f32.mrb[0].mxu0
        %v699 = vadd.f32 0.0, %v698
        %v700 = vpop.f32.mrb[0].mxu0
        %701 = vmatprep.mubr.f32.mxu0 %v364
        %702 = vmatmul.mubr.f32.gmra.mrb[0].mxu0 %v363
        %v703 = vpop.f32.mrb[0].mxu0
        %v704 = vadd.f32 0.0, %v703
        %v705 = vpop.f32.mrb[0].mxu0
        %706 = vmatprep.mubr.f32.mxu0 %v366
        %707 = vmatmul.mubr.f32.gmra.mrb[0].mxu0 %v365
        %v708 = vpop.f32.mrb[0].mxu0
        %v709 = vadd.f32 0.0, %v708
        %v710 = vpop.f32.mrb[0].mxu0
        %711 = vmatprep.mubr.f32.mxu0 %v368
        %712 = vmatmul.mubr.f32.gmra.mrb[0].mxu0 %v367
        %v713 = vpop.f32.mrb[0].mxu0
        %v714 = vadd.f32 0.0, %v713
        %v715 = vpop.f32.mrb[0].mxu0
        %716 = vmatprep.mubr.f32.mxu0 %v370
        %717 = vmatmul.mubr.f32.gmra.mrb[0].mxu0 %v369
        %v718 = vpop.f32.mrb[0].mxu0
        %v719 = vadd.f32 0.0, %v718
        %v720 = vpop.f32.mrb[0].mxu0
        %721 = vmatprep.mubr.f32.mxu0 %v372
        %722 = vmatmul.mubr.f32.gmra.mrb[0].mxu0 %v371
        %v723 = vpop.f32.mrb[0].mxu0
        %v724 = vadd.f32 0.0, %v723
        %v725 = vpop.f32.mrb[0].mxu0
        %726 = vdwg.mxu0
        %v727 = vsub.f32 %v504, %v649
        %v728 = vsub.f32 %v509, %v654
        %v729 = vsub.f32 %v514, %v659
        %v730 = vsub.f32 %v519, %v664
        %v731 = vsub.f32 %v524, %v669
        %v732 = vsub.f32 %v529, %v674
        %v733 = vsub.f32 %v534, %v679
        %v734 = vsub.f32 %v539, %v684
        %v735 = vsub.f32 %v544, %v689
        %v736 = vsub.f32 %v549, %v694
        %v737 = vsub.f32 %v554, %v699
        %v738 = vsub.f32 %v559, %v704
        %v739 = vsub.f32 %v564, %v709
        %v740 = vsub.f32 %v569, %v714
        %v741 = vsub.f32 %v574, %v719
        %v742 = vsub.f32 %v579, %v724
        %743 = vmatprep.subr.mxu0 0.0
        %744 = vmatpush1.msra.mxu0 %v373
        %745 = vmatprep.subr.mxu0 0.0
        %746 = vmatpush1.msra.mxu0 %v374
        %747 = vmatprep.subr.mxu0 0.0
        %748 = vmatpush1.msra.mxu0 %v375
        %749 = vmatprep.subr.mxu0 0.0
        %750 = vmatpush1.msra.mxu0 %v376
        %751 = vmatprep.subr.mxu0 0.0
        %752 = vmatpush1.msra.mxu0 %v377
        %753 = vmatprep.subr.mxu0 0.0
        %754 = vmatpush1.msra.mxu0 %v378
        %755 = vmatprep.subr.mxu0 0.0
        %756 = vmatpush1.msra.mxu0 %v379
        %757 = vmatprep.subr.mxu0 0.0
        %758 = vmatpush1.msra.mxu0 %v380
        %759 = vmatprep.subr.mxu0 0.0
        %760 = vmatpush1.msra.mxu0 %v381
        %761 = vmatprep.subr.mxu0 0.0
        %762 = vmatpush1.msra.mxu0 %v382
        %763 = vmatprep.subr.mxu0 0.0
        %764 = vmatpush1.msra.mxu0 %v383
        %765 = vmatprep.subr.mxu0 0.0
        %766 = vmatpush1.msra.mxu0 %v384
        %767 = vmatprep.subr.mxu0 0.0
        %768 = vmatpush1.msra.mxu0 %v385
        %769 = vmatprep.subr.mxu0 0.0
        %770 = vmatpush1.msra.mxu0 %v386
        %771 = vmatprep.subr.mxu0 0.0
        %772 = vmatpush1.msra.mxu0 %v387
        %773 = vmatprep.subr.mxu0 0.0
        %774 = vmatpush1.msra.mxu0 %v388
        %775 = vmatprep.subr.mxu0 0.0
        %776 = vmatpush1.msra.mxu0 %v389
        %777 = vmatprep.subr.mxu0 0.0
        %778 = vmatpush1.msra.mxu0 %v390
        %779 = vmatprep.subr.mxu0 0.0
        %780 = vmatpush1.msra.mxu0 %v391
        %781 = vmatprep.subr.mxu0 0.0
        %782 = vmatpush1.msra.mxu0 %v392
        %783 = vmatprep.subr.mxu0 0.0
        %784 = vmatpush1.msra.mxu0 %v393
        %785 = vmatprep.subr.mxu0 0.0
        %786 = vmatpush1.msra.mxu0 %v394
        %787 = vmatprep.subr.mxu0 0.0
        %788 = vmatpush1.msra.mxu0 %v395
        %789 = vmatprep.subr.mxu0 0.0
        %790 = vmatpush1.msra.mxu0 %v396
        %791 = vmatprep.subr.mxu0 0.0
        %792 = vmatpush1.msra.mxu0 %v397
        %793 = vmatprep.subr.mxu0 0.0
        %794 = vmatpush1.msra.mxu0 %v398
        %795 = vmatprep.subr.mxu0 0.0
        %796 = vmatpush1.msra.mxu0 %v399
        %797 = vmatprep.subr.mxu0 0.0
        %798 = vmatpush1.msra.mxu0 %v400
        %799 = vmatprep.subr.mxu0 0.0
        %800 = vmatpush1.msra.mxu0 %v401
        %801 = vmatprep.subr.mxu0 0.0
        %802 = vmatpush1.msra.mxu0 %v402
        %803 = vmatprep.subr.mxu0 0.0
        %804 = vmatpush1.msra.mxu0 %v403
        %805 = vmatprep.subr.mxu0 0.0
        %806 = vmatpush1.msra.mxu0 %v404
        %807 = vmatprep.mubr.f32.mxu0 %v342
        %808 = vmatmul.mubr.f32.gmra.mrb[0].mxu0 %v341
        %v809 = vpop.f32.mrb[0].mxu0
        %v810 = vadd.f32 0.0, %v809
        %v811 = vpop.f32.mrb[0].mxu0
        %812 = vmatprep.mubr.f32.mxu0 %v344
        %813 = vmatmul.mubr.f32.gmra.mrb[0].mxu0 %v343
        %v814 = vpop.f32.mrb[0].mxu0
        %v815 = vadd.f32 0.0, %v814
        %v816 = vpop.f32.mrb[0].mxu0
        %817 = vmatprep.mubr.f32.mxu0 %v346
        %818 = vmatmul.mubr.f32.gmra.mrb[0].mxu0 %v345
        %v819 = vpop.f32.mrb[0].mxu0
        %v820 = vadd.f32 0.0, %v819
        %v821 = vpop.f32.mrb[0].mxu0
        %822 = vmatprep.mubr.f32.mxu0 %v348
        %823 = vmatmul.mubr.f32.gmra.mrb[0].mxu0 %v347
        %v824 = vpop.f32.mrb[0].mxu0
        %v825 = vadd.f32 0.0, %v824
        %v826 = vpop.f32.mrb[0].mxu0
        %827 = vmatprep.mubr.f32.mxu0 %v350
        %828 = vmatmul.mubr.f32.gmra.mrb[0].mxu0 %v349
        %v829 = vpop.f32.mrb[0].mxu0
        %v830 = vadd.f32 0.0, %v829
        %v831 = vpop.f32.mrb[0].mxu0
        %832 = vmatprep.mubr.f32.mxu0 %v352
        %833 = vmatmul.mubr.f32.gmra.mrb[0].mxu0 %v351
        %v834 = vpop.f32.mrb[0].mxu0
        %v835 = vadd.f32 0.0, %v834
        %v836 = vpop.f32.mrb[0].mxu0
        %837 = vmatprep.mubr.f32.mxu0 %v354
        %838 = vmatmul.mubr.f32.gmra.mrb[0].mxu0 %v353
        %v839 = vpop.f32.mrb[0].mxu0
        %v840 = vadd.f32 0.0, %v839
        %v841 = vpop.f32.mrb[0].mxu0
        %842 = vmatprep.mubr.f32.mxu0 %v356
        %843 = vmatmul.mubr.f32.gmra.mrb[0].mxu0 %v355
        %v844 = vpop.f32.mrb[0].mxu0
        %v845 = vadd.f32 0.0, %v844
        %v846 = vpop.f32.mrb[0].mxu0
        %847 = vmatprep.mubr.f32.mxu0 %v358
        %848 = vmatmul.mubr.f32.gmra.mrb[0].mxu0 %v357
        %v849 = vpop.f32.mrb[0].mxu0
        %v850 = vadd.f32 0.0, %v849
        %v851 = vpop.f32.mrb[0].mxu0
        %852 = vmatprep.mubr.f32.mxu0 %v360
        %853 = vmatmul.mubr.f32.gmra.mrb[0].mxu0 %v359
        %v854 = vpop.f32.mrb[0].mxu0
        %v855 = vadd.f32 0.0, %v854
        %v856 = vpop.f32.mrb[0].mxu0
        %857 = vmatprep.mubr.f32.mxu0 %v362
        %858 = vmatmul.mubr.f32.gmra.mrb[0].mxu0 %v361
        %v859 = vpop.f32.mrb[0].mxu0
        %v860 = vadd.f32 0.0, %v859
        %v861 = vpop.f32.mrb[0].mxu0
        %862 = vmatprep.mubr.f32.mxu0 %v364
        %863 = vmatmul.mubr.f32.gmra.mrb[0].mxu0 %v363
        %v864 = vpop.f32.mrb[0].mxu0
        %v865 = vadd.f32 0.0, %v864
        %v866 = vpop.f32.mrb[0].mxu0
        %867 = vmatprep.mubr.f32.mxu0 %v366
        %868 = vmatmul.mubr.f32.gmra.mrb[0].mxu0 %v365
        %v869 = vpop.f32.mrb[0].mxu0
        %v870 = vadd.f32 0.0, %v869
        %v871 = vpop.f32.mrb[0].mxu0
        %872 = vmatprep.mubr.f32.mxu0 %v368
        %873 = vmatmul.mubr.f32.gmra.mrb[0].mxu0 %v367
        %v874 = vpop.f32.mrb[0].mxu0
        %v875 = vadd.f32 0.0, %v874
        %v876 = vpop.f32.mrb[0].mxu0
        %877 = vmatprep.mubr.f32.mxu0 %v370
        %878 = vmatmul.mubr.f32.gmra.mrb[0].mxu0 %v369
        %v879 = vpop.f32.mrb[0].mxu0
        %v880 = vadd.f32 0.0, %v879
        %v881 = vpop.f32.mrb[0].mxu0
        %882 = vmatprep.mubr.f32.mxu0 %v372
        %883 = vmatmul.mubr.f32.gmra.mrb[0].mxu0 %v371
        %v884 = vpop.f32.mrb[0].mxu0
        %v885 = vadd.f32 0.0, %v884
        %v886 = vpop.f32.mrb[0].mxu0
        %887 = vdwg.mxu0
        %888 = vmatprep.subr.mxu0 0.0
        %889 = vmatpush1.msra.mxu0 %v405
        %890 = vmatprep.subr.mxu0 0.0
        %891 = vmatpush1.msra.mxu0 %v406
        %892 = vmatprep.subr.mxu0 0.0
        %893 = vmatpush1.msra.mxu0 %v407
        %894 = vmatprep.subr.mxu0 0.0
        %895 = vmatpush1.msra.mxu0 %v408
        %896 = vmatprep.subr.mxu0 0.0
        %897 = vmatpush1.msra.mxu0 %v409
        %898 = vmatprep.subr.mxu0 0.0
        %899 = vmatpush1.msra.mxu0 %v410
        %900 = vmatprep.subr.mxu0 0.0
        %901 = vmatpush1.msra.mxu0 %v411
        %902 = vmatprep.subr.mxu0 0.0
        %903 = vmatpush1.msra.mxu0 %v412
        %904 = vmatprep.subr.mxu0 0.0
        %905 = vmatpush1.msra.mxu0 %v413
        %906 = vmatprep.subr.mxu0 0.0
        %907 = vmatpush1.msra.mxu0 %v414
        %908 = vmatprep.subr.mxu0 0.0
        %909 = vmatpush1.msra.mxu0 %v415
        %910 = vmatprep.subr.mxu0 0.0
        %911 = vmatpush1.msra.mxu0 %v416
        %912 = vmatprep.subr.mxu0 0.0
        %913 = vmatpush1.msra.mxu0 %v417
        %914 = vmatprep.subr.mxu0 0.0
        %915 = vmatpush1.msra.mxu0 %v418
        %916 = vmatprep.subr.mxu0 0.0
        %917 = vmatpush1.msra.mxu0 %v419
        %918 = vmatprep.subr.mxu0 0.0
        %919 = vmatpush1.msra.mxu0 %v420
        %920 = vmatprep.subr.mxu0 0.0
        %921 = vmatpush1.msra.mxu0 %v421
        %922 = vmatprep.subr.mxu0 0.0
        %923 = vmatpush1.msra.mxu0 %v422
        %924 = vmatprep.subr.mxu0 0.0
        %925 = vmatpush1.msra.mxu0 %v423
        %926 = vmatprep.subr.mxu0 0.0
        %927 = vmatpush1.msra.mxu0 %v424
        %928 = vmatprep.subr.mxu0 0.0
        %929 = vmatpush1.msra.mxu0 %v425
        %930 = vmatprep.subr.mxu0 0.0
        %931 = vmatpush1.msra.mxu0 %v426
        %932 = vmatprep.subr.mxu0 0.0
        %933 = vmatpush1.msra.mxu0 %v427
        %934 = vmatprep.subr.mxu0 0.0
        %935 = vmatpush1.msra.mxu0 %v428
        %936 = vmatprep.subr.mxu0 0.0
        %937 = vmatpush1.msra.mxu0 %v429
        %938 = vmatprep.subr.mxu0 0.0
        %939 = vmatpush1.msra.mxu0 %v430
        %940 = vmatprep.subr.mxu0 0.0
        %941 = vmatpush1.msra.mxu0 %v431
        %942 = vmatprep.subr.mxu0 0.0
        %943 = vmatpush1.msra.mxu0 %v432
        %944 = vmatprep.subr.mxu0 0.0
        %945 = vmatpush1.msra.mxu0 %v433
        %946 = vmatprep.subr.mxu0 0.0
        %947 = vmatpush1.msra.mxu0 %v434
        %948 = vmatprep.subr.mxu0 0.0
        %949 = vmatpush1.msra.mxu0 %v435
        %950 = vmatprep.subr.mxu0 0.0
        %951 = vmatpush1.msra.mxu0 %v436
        %952 = vmatprep.mubr.f32.mxu0 %v310
        %953 = vmatmul.mubr.f32.gmra.mrb[0].mxu0 %v309
        %v954 = vpop.f32.mrb[0].mxu0
        %v955 = vadd.f32 %v810, %v954
        %v956 = vpop.f32.mrb[0].mxu0
        %957 = vmatprep.mubr.f32.mxu0 %v312
        %958 = vmatmul.mubr.f32.gmra.mrb[0].mxu0 %v311
        %v959 = vpop.f32.mrb[0].mxu0
        %v960 = vadd.f32 %v815, %v959
        %v961 = vpop.f32.mrb[0].mxu0
        %962 = vmatprep.mubr.f32.mxu0 %v314
        %963 = vmatmul.mubr.f32.gmra.mrb[0].mxu0 %v313
        %v964 = vpop.f32.mrb[0].mxu0
        %v965 = vadd.f32 %v820, %v964
        %v966 = vpop.f32.mrb[0].mxu0
        %967 = vmatprep.mubr.f32.mxu0 %v316
        %968 = vmatmul.mubr.f32.gmra.mrb[0].mxu0 %v315
        %v969 = vpop.f32.mrb[0].mxu0
        %v970 = vadd.f32 %v825, %v969
        %v971 = vpop.f32.mrb[0].mxu0
        %972 = vmatprep.mubr.f32.mxu0 %v318
        %973 = vmatmul.mubr.f32.gmra.mrb[0].mxu0 %v317
        %v974 = vpop.f32.mrb[0].mxu0
        %v975 = vadd.f32 %v830, %v974
        %v976 = vpop.f32.mrb[0].mxu0
        %977 = vmatprep.mubr.f32.mxu0 %v320
        %978 = vmatmul.mubr.f32.gmra.mrb[0].mxu0 %v319
        %v979 = vpop.f32.mrb[0].mxu0
        %v980 = vadd.f32 %v835, %v979
        %v981 = vpop.f32.mrb[0].mxu0
        %982 = vmatprep.mubr.f32.mxu0 %v322
        %983 = vmatmul.mubr.f32.gmra.mrb[0].mxu0 %v321
        %v984 = vpop.f32.mrb[0].mxu0
        %v985 = vadd.f32 %v840, %v984
        %v986 = vpop.f32.mrb[0].mxu0
        %987 = vmatprep.mubr.f32.mxu0 %v324
        %988 = vmatmul.mubr.f32.gmra.mrb[0].mxu0 %v323
        %v989 = vpop.f32.mrb[0].mxu0
        %v990 = vadd.f32 %v845, %v989
        %v991 = vpop.f32.mrb[0].mxu0
        %992 = vmatprep.mubr.f32.mxu0 %v326
        %993 = vmatmul.mubr.f32.gmra.mrb[0].mxu0 %v325
        %v994 = vpop.f32.mrb[0].mxu0
        %v995 = vadd.f32 %v850, %v994
        %v996 = vpop.f32.mrb[0].mxu0
        %997 = vmatprep.mubr.f32.mxu0 %v328
        %998 = vmatmul.mubr.f32.gmra.mrb[0].mxu0 %v327
        %v999 = vpop.f32.mrb[0].mxu0
        %v1000 = vadd.f32 %v855, %v999
        %v1001 = vpop.f32.mrb[0].mxu0
        %1002 = vmatprep.mubr.f32.mxu0 %v330
        %1003 = vmatmul.mubr.f32.gmra.mrb[0].mxu0 %v329
        %v1004 = vpop.f32.mrb[0].mxu0
        %v1005 = vadd.f32 %v860, %v1004
        %v1006 = vpop.f32.mrb[0].mxu0
        %1007 = vmatprep.mubr.f32.mxu0 %v332
        %1008 = vmatmul.mubr.f32.gmra.mrb[0].mxu0 %v331
        %v1009 = vpop.f32.mrb[0].mxu0
        %v1010 = vadd.f32 %v865, %v1009
        %v1011 = vpop.f32.mrb[0].mxu0
        %1012 = vmatprep.mubr.f32.mxu0 %v334
        %1013 = vmatmul.mubr.f32.gmra.mrb[0].mxu0 %v333
        %v1014 = vpop.f32.mrb[0].mxu0
        %v1015 = vadd.f32 %v870, %v1014
        %v1016 = vpop.f32.mrb[0].mxu0
        %1017 = vmatprep.mubr.f32.mxu0 %v336
        %1018 = vmatmul.mubr.f32.gmra.mrb[0].mxu0 %v335
        %v1019 = vpop.f32.mrb[0].mxu0
        %v1020 = vadd.f32 %v875, %v1019
        %v1021 = vpop.f32.mrb[0].mxu0
        %1022 = vmatprep.mubr.f32.mxu0 %v338
        %1023 = vmatmul.mubr.f32.gmra.mrb[0].mxu0 %v337
        %v1024 = vpop.f32.mrb[0].mxu0
        %v1025 = vadd.f32 %v880, %v1024
        %v1026 = vpop.f32.mrb[0].mxu0
        %1027 = vmatprep.mubr.f32.mxu0 %v340
        %1028 = vmatmul.mubr.f32.gmra.mrb[0].mxu0 %v339
        %v1029 = vpop.f32.mrb[0].mxu0
        %v1030 = vadd.f32 %v885, %v1029
        %v1031 = vpop.f32.mrb[0].mxu0
        %1032 = vdwg.mxu0
        %v1033 = vld [vmem:[%s283] sm:$0x3]
        %v1034 = vld [vmem:[%s287] sm:$0x3]
        %v1035 = vld [vmem:[#allocation2] sm:$0x3]
        %1036 = vmatprep.subr.mxu0 0.0
        %1037 = vmatpush1.msra.mxu0 %v727
        %1038 = vmatprep.subr.mxu0 0.0
        %1039 = vmatpush1.msra.mxu0 %v728
        %1040 = vmatprep.subr.mxu0 0.0
        %1041 = vmatpush1.msra.mxu0 %v729
        %1042 = vmatprep.subr.mxu0 0.0
        %1043 = vmatpush1.msra.mxu0 %v730
        %1044 = vmatprep.subr.mxu0 0.0
        %1045 = vmatpush1.msra.mxu0 %v731
        %1046 = vmatprep.subr.mxu0 0.0
        %1047 = vmatpush1.msra.mxu0 %v732
        %1048 = vmatprep.subr.mxu0 0.0
        %1049 = vmatpush1.msra.mxu0 %v733
        %1050 = vmatprep.subr.mxu0 0.0
        %1051 = vmatpush1.msra.mxu0 %v734
        %1052 = vmatprep.subr.mxu0 0.0
        %1053 = vmatpush1.msra.mxu0 %v735
        %1054 = vmatprep.subr.mxu0 0.0
        %1055 = vmatpush1.msra.mxu0 %v736
        %1056 = vmatprep.subr.mxu0 0.0
        %1057 = vmatpush1.msra.mxu0 %v737
        %1058 = vmatprep.subr.mxu0 0.0
        %1059 = vmatpush1.msra.mxu0 %v738
        %1060 = vmatprep.subr.mxu0 0.0
        %1061 = vmatpush1.msra.mxu0 %v739
        %1062 = vmatprep.subr.mxu0 0.0
        %1063 = vmatpush1.msra.mxu0 %v740
        %1064 = vmatprep.subr.mxu0 0.0
        %1065 = vmatpush1.msra.mxu0 %v741
        %1066 = vmatprep.subr.mxu0 0.0
        %1067 = vmatpush1.msra.mxu0 %v742
        %1068 = vmatprep.subr.mxu0 0.0
        %1069 = vmatpush1.msra.mxu0 0.0
        %1070 = vmatprep.subr.mxu0 0.0
        %1071 = vmatpush1.msra.mxu0 0.0
        %1072 = vmatprep.subr.mxu0 0.0
        %1073 = vmatpush1.msra.mxu0 0.0
        %1074 = vmatprep.subr.mxu0 0.0
        %1075 = vmatpush1.msra.mxu0 0.0
        %1076 = vmatprep.subr.mxu0 0.0
        %1077 = vmatpush1.msra.mxu0 0.0
        %1078 = vmatprep.subr.mxu0 0.0
        %1079 = vmatpush1.msra.mxu0 0.0
        %1080 = vmatprep.subr.mxu0 0.0
        %1081 = vmatpush1.msra.mxu0 0.0
        %1082 = vmatprep.subr.mxu0 0.0
        %1083 = vmatpush1.msra.mxu0 0.0
        %1084 = vmatprep.subr.mxu0 0.0
        %1085 = vmatpush1.msra.mxu0 0.0
        %1086 = vmatprep.subr.mxu0 0.0
        %1087 = vmatpush1.msra.mxu0 0.0
        %1088 = vmatprep.subr.mxu0 0.0
        %1089 = vmatpush1.msra.mxu0 0.0
        %1090 = vmatprep.subr.mxu0 0.0
        %1091 = vmatpush1.msra.mxu0 0.0
        %1092 = vmatprep.subr.mxu0 0.0
        %1093 = vmatpush1.msra.mxu0 0.0
        %1094 = vmatprep.subr.mxu0 0.0
        %1095 = vmatpush1.msra.mxu0 0.0
        %1096 = vmatprep.subr.mxu0 0.0
        %1097 = vmatpush1.msra.mxu0 0.0
        %1098 = vmatprep.subr.mxu0 0.0
        %1099 = vmatpush1.msra.mxu0 0.0
        %1100 = vmatprep.mubr.f32.mxu0 0.0
        %1101 = vmatmul.mubr.f32.gmra.mrb[0].mxu0 %v1033
        %v1102 = vpop.f32.mrb[0].mxu0
        %v1103 = vadd.f32 0.0, %v1102
        %v1104 = vpop.f32.mrb[0].mxu0
        %1105 = vdwg.mxu0
        %1106 = vmatprep.subr.mxu0 0.0
        %1107 = vmatpush1.msra.mxu0 %v955
        %1108 = vmatprep.subr.mxu0 0.0
        %1109 = vmatpush1.msra.mxu0 %v960
        %1110 = vmatprep.subr.mxu0 0.0
        %1111 = vmatpush1.msra.mxu0 %v965
        %1112 = vmatprep.subr.mxu0 0.0
        %1113 = vmatpush1.msra.mxu0 %v970
        %1114 = vmatprep.subr.mxu0 0.0
        %1115 = vmatpush1.msra.mxu0 %v975
        %1116 = vmatprep.subr.mxu0 0.0
        %1117 = vmatpush1.msra.mxu0 %v980
        %1118 = vmatprep.subr.mxu0 0.0
        %1119 = vmatpush1.msra.mxu0 %v985
        %1120 = vmatprep.subr.mxu0 0.0
        %1121 = vmatpush1.msra.mxu0 %v990
        %1122 = vmatprep.subr.mxu0 0.0
        %1123 = vmatpush1.msra.mxu0 %v995
        %1124 = vmatprep.subr.mxu0 0.0
        %1125 = vmatpush1.msra.mxu0 %v1000
        %1126 = vmatprep.subr.mxu0 0.0
        %1127 = vmatpush1.msra.mxu0 %v1005
        %1128 = vmatprep.subr.mxu0 0.0
        %1129 = vmatpush1.msra.mxu0 %v1010
        %1130 = vmatprep.subr.mxu0 0.0
        %1131 = vmatpush1.msra.mxu0 %v1015
        %1132 = vmatprep.subr.mxu0 0.0
        %1133 = vmatpush1.msra.mxu0 %v1020
        %1134 = vmatprep.subr.mxu0 0.0
        %1135 = vmatpush1.msra.mxu0 %v1025
        %1136 = vmatprep.subr.mxu0 0.0
        %1137 = vmatpush1.msra.mxu0 %v1030
        %1138 = vmatprep.subr.mxu0 0.0
        %1139 = vmatpush1.msra.mxu0 0.0
        %1140 = vmatprep.subr.mxu0 0.0
        %1141 = vmatpush1.msra.mxu0 0.0
        %1142 = vmatprep.subr.mxu0 0.0
        %1143 = vmatpush1.msra.mxu0 0.0
        %1144 = vmatprep.subr.mxu0 0.0
        %1145 = vmatpush1.msra.mxu0 0.0
        %1146 = vmatprep.subr.mxu0 0.0
        %1147 = vmatpush1.msra.mxu0 0.0
        %1148 = vmatprep.subr.mxu0 0.0
        %1149 = vmatpush1.msra.mxu0 0.0
        %1150 = vmatprep.subr.mxu0 0.0
        %1151 = vmatpush1.msra.mxu0 0.0
        %1152 = vmatprep.subr.mxu0 0.0
        %1153 = vmatpush1.msra.mxu0 0.0
        %1154 = vmatprep.subr.mxu0 0.0
        %1155 = vmatpush1.msra.mxu0 0.0
        %1156 = vmatprep.subr.mxu0 0.0
        %1157 = vmatpush1.msra.mxu0 0.0
        %1158 = vmatprep.subr.mxu0 0.0
        %1159 = vmatpush1.msra.mxu0 0.0
        %1160 = vmatprep.subr.mxu0 0.0
        %1161 = vmatpush1.msra.mxu0 0.0
        %1162 = vmatprep.subr.mxu0 0.0
        %1163 = vmatpush1.msra.mxu0 0.0
        %1164 = vmatprep.subr.mxu0 0.0
        %1165 = vmatpush1.msra.mxu0 0.0
        %1166 = vmatprep.subr.mxu0 0.0
        %1167 = vmatpush1.msra.mxu0 0.0
        %1168 = vmatprep.subr.mxu0 0.0
        %1169 = vmatpush1.msra.mxu0 0.0
        %1170 = vmatprep.mubr.f32.mxu0 0.0
        %1171 = vmatmul.mubr.f32.gmra.mrb[0].mxu0 %v1034
        %v1172 = vpop.f32.mrb[0].mxu0
        %v1173 = vadd.f32 0.0, %v1172
        %v1174 = vpop.f32.mrb[0].mxu0
        %1175 = vdwg.mxu0
        %v1176 = vsub.f32 %v1103, %v1173
        %v1177 = vadd.f32 %v1035, %v1176
        %vm1178 = vcmask 9216
        %1179 = vst.msk [vmem:[#allocation2] sm:$0x3] %vm1178, %v1177
        %v1180 = vld [vmem:[#allocation3] sm:$0x3]
        %1181 = vmatprep.subr.mxu0 0.0
        %1182 = vmatpush1.msra.mxu0 %v727
        %1183 = vmatprep.subr.mxu0 0.0
        %1184 = vmatpush1.msra.mxu0 %v728
        %1185 = vmatprep.subr.mxu0 0.0
        %1186 = vmatpush1.msra.mxu0 %v729
        %1187 = vmatprep.subr.mxu0 0.0
        %1188 = vmatpush1.msra.mxu0 %v730
        %1189 = vmatprep.subr.mxu0 0.0
        %1190 = vmatpush1.msra.mxu0 %v731
        %1191 = vmatprep.subr.mxu0 0.0
        %1192 = vmatpush1.msra.mxu0 %v732
        %1193 = vmatprep.subr.mxu0 0.0
        %1194 = vmatpush1.msra.mxu0 %v733
        %1195 = vmatprep.subr.mxu0 0.0
        %1196 = vmatpush1.msra.mxu0 %v734
        %1197 = vmatprep.subr.mxu0 0.0
        %1198 = vmatpush1.msra.mxu0 %v735
        %1199 = vmatprep.subr.mxu0 0.0
        %1200 = vmatpush1.msra.mxu0 %v736
        %1201 = vmatprep.subr.mxu0 0.0
        %1202 = vmatpush1.msra.mxu0 %v737
        %1203 = vmatprep.subr.mxu0 0.0
        %1204 = vmatpush1.msra.mxu0 %v738
        %1205 = vmatprep.subr.mxu0 0.0
        %1206 = vmatpush1.msra.mxu0 %v739
        %1207 = vmatprep.subr.mxu0 0.0
        %1208 = vmatpush1.msra.mxu0 %v740
        %1209 = vmatprep.subr.mxu0 0.0
        %1210 = vmatpush1.msra.mxu0 %v741
        %1211 = vmatprep.subr.mxu0 0.0
        %1212 = vmatpush1.msra.mxu0 %v742
        %1213 = vmatprep.subr.mxu0 0.0
        %1214 = vmatpush1.msra.mxu0 0.0
        %1215 = vmatprep.subr.mxu0 0.0
        %1216 = vmatpush1.msra.mxu0 0.0
        %1217 = vmatprep.subr.mxu0 0.0
        %1218 = vmatpush1.msra.mxu0 0.0
        %1219 = vmatprep.subr.mxu0 0.0
        %1220 = vmatpush1.msra.mxu0 0.0
        %1221 = vmatprep.subr.mxu0 0.0
        %1222 = vmatpush1.msra.mxu0 0.0
        %1223 = vmatprep.subr.mxu0 0.0
        %1224 = vmatpush1.msra.mxu0 0.0
        %1225 = vmatprep.subr.mxu0 0.0
        %1226 = vmatpush1.msra.mxu0 0.0
        %1227 = vmatprep.subr.mxu0 0.0
        %1228 = vmatpush1.msra.mxu0 0.0
        %1229 = vmatprep.subr.mxu0 0.0
        %1230 = vmatpush1.msra.mxu0 0.0
        %1231 = vmatprep.subr.mxu0 0.0
        %1232 = vmatpush1.msra.mxu0 0.0
        %1233 = vmatprep.subr.mxu0 0.0
        %1234 = vmatpush1.msra.mxu0 0.0
        %1235 = vmatprep.subr.mxu0 0.0
        %1236 = vmatpush1.msra.mxu0 0.0
        %1237 = vmatprep.subr.mxu0 0.0
        %1238 = vmatpush1.msra.mxu0 0.0
        %1239 = vmatprep.subr.mxu0 0.0
        %1240 = vmatpush1.msra.mxu0 0.0
        %1241 = vmatprep.subr.mxu0 0.0
        %1242 = vmatpush1.msra.mxu0 0.0
        %1243 = vmatprep.subr.mxu0 0.0
        %1244 = vmatpush1.msra.mxu0 0.0
        %1245 = vmatprep.mubr.f32.mxu0 0.0
        %1246 = vmatmul.mubr.f32.gmra.mrb[0].mxu0 %v1034
        %v1247 = vpop.f32.mrb[0].mxu0
        %v1248 = vadd.f32 0.0, %v1247
        %v1249 = vpop.f32.mrb[0].mxu0
        %1250 = vdwg.mxu0
        %1251 = vmatprep.subr.mxu0 0.0
        %1252 = vmatpush1.msra.mxu0 %v955
        %1253 = vmatprep.subr.mxu0 0.0
        %1254 = vmatpush1.msra.mxu0 %v960
        %1255 = vmatprep.subr.mxu0 0.0
        %1256 = vmatpush1.msra.mxu0 %v965
        %1257 = vmatprep.subr.mxu0 0.0
        %1258 = vmatpush1.msra.mxu0 %v970
        %1259 = vmatprep.subr.mxu0 0.0
        %1260 = vmatpush1.msra.mxu0 %v975
        %1261 = vmatprep.subr.mxu0 0.0
        %1262 = vmatpush1.msra.mxu0 %v980
        %1263 = vmatprep.subr.mxu0 0.0
        %1264 = vmatpush1.msra.mxu0 %v985
        %1265 = vmatprep.subr.mxu0 0.0
        %1266 = vmatpush1.msra.mxu0 %v990
        %1267 = vmatprep.subr.mxu0 0.0
        %1268 = vmatpush1.msra.mxu0 %v995
        %1269 = vmatprep.subr.mxu0 0.0
        %1270 = vmatpush1.msra.mxu0 %v1000
        %1271 = vmatprep.subr.mxu0 0.0
        %1272 = vmatpush1.msra.mxu0 %v1005
        %1273 = vmatprep.subr.mxu0 0.0
        %1274 = vmatpush1.msra.mxu0 %v1010
        %1275 = vmatprep.subr.mxu0 0.0
        %1276 = vmatpush1.msra.mxu0 %v1015
        %1277 = vmatprep.subr.mxu0 0.0
        %1278 = vmatpush1.msra.mxu0 %v1020
        %1279 = vmatprep.subr.mxu0 0.0
        %1280 = vmatpush1.msra.mxu0 %v1025
        %1281 = vmatprep.subr.mxu0 0.0
        %1282 = vmatpush1.msra.mxu0 %v1030
        %1283 = vmatprep.subr.mxu0 0.0
        %1284 = vmatpush1.msra.mxu0 0.0
        %1285 = vmatprep.subr.mxu0 0.0
        %1286 = vmatpush1.msra.mxu0 0.0
        %1287 = vmatprep.subr.mxu0 0.0
        %1288 = vmatpush1.msra.mxu0 0.0
        %1289 = vmatprep.subr.mxu0 0.0
        %1290 = vmatpush1.msra.mxu0 0.0
        %1291 = vmatprep.subr.mxu0 0.0
        %1292 = vmatpush1.msra.mxu0 0.0
        %1293 = vmatprep.subr.mxu0 0.0
        %1294 = vmatpush1.msra.mxu0 0.0
        %1295 = vmatprep.subr.mxu0 0.0
        %1296 = vmatpush1.msra.mxu0 0.0
        %1297 = vmatprep.subr.mxu0 0.0
        %1298 = vmatpush1.msra.mxu0 0.0
        %1299 = vmatprep.subr.mxu0 0.0
        %1300 = vmatpush1.msra.mxu0 0.0
        %1301 = vmatprep.subr.mxu0 0.0
        %1302 = vmatpush1.msra.mxu0 0.0
        %1303 = vmatprep.subr.mxu0 0.0
        %1304 = vmatpush1.msra.mxu0 0.0
        %1305 = vmatprep.subr.mxu0 0.0
        %1306 = vmatpush1.msra.mxu0 0.0
        %1307 = vmatprep.subr.mxu0 0.0
        %1308 = vmatpush1.msra.mxu0 0.0
        %1309 = vmatprep.subr.mxu0 0.0
        %1310 = vmatpush1.msra.mxu0 0.0
        %1311 = vmatprep.subr.mxu0 0.0
        %1312 = vmatpush1.msra.mxu0 0.0
        %1313 = vmatprep.subr.mxu0 0.0
        %1314 = vmatpush1.msra.mxu0 0.0
        %1315 = vmatprep.mubr.f32.mxu0 0.0
        %1316 = vmatmul.mubr.f32.gmra.mrb[0].mxu0 %v1033
        %v1317 = vpop.f32.mrb[0].mxu0
        %v1318 = vadd.f32 %v1248, %v1317
        %v1319 = vpop.f32.mrb[0].mxu0
        %1320 = vdwg.mxu0
        %v1321 = vadd.f32 %v1180, %v1318
        %1322 = vst.msk [vmem:[#allocation3] sm:$0x3] %vm1178, %v1321
        %p1323 = scmp.eq.s32.totalorder %s18, 1
        // Predicated region
        $region49: #{qecc_equal_overlap_sq.1} parent=43 // pred_check
          %p1324 = pneg %p1323
        $region50: #{qecc_equal_overlap_sq.1} parent=43 // pred_check_branch
          %1326 = sbr.rel (%p1324) target = $region52
        $region51: #{qecc_equal_overlap_sq.1} parent=43 // pred_region
          %v1327 = vld [vmem:[#allocation2] sm:$0x3]
          %v1328 = vld [vmem:[#allocation3] sm:$0x3]
          %v1329 = vmul.f32 %v1327, %v1327
          %v1330 = vmul.f32 %v1328, %v1328
          %v1331 = vadd.f32 %v1329, %v1330
          %v1332 = vsel %vm1178, %v1331, 0.0
          %1333 = vadd.xlane.f32.xlu0 %v1332
          %v1334 = vpop.xlane.xlu0 %1333
          %v1335 = vrot.slane %v1334, 4
          %v1336 = vadd.f32 %v1334, %v1335
          %v1337 = vrot.slane %v1336, 2
          %v1338 = vadd.f32 %v1336, %v1337
          %v1339 = vrot.slane %v1338, 1
          %v1340 = vadd.f32 %v1338, %v1339
          %s1341 = vtos %v1340
          %s1342 = scalar_lea.smem [#allocation4], 0
          %1343 = sst [smem:[%s1342]] %s1341
        $region52: #{qecc_equal_overlap_sq.1} parent=43 // pred_fallthru
          _
        // Predicated region
        $region53: #{qecc_equal_overlap_sq.1} parent=43 // pred_check
          %p1344 = pneg %p177
        $region54: #{qecc_equal_overlap_sq.1} parent=43 // pred_check_branch
          %1346 = sbr.rel (%p1344) target = $region56
        $region55: #{qecc_equal_overlap_sq.1} parent=43 // pred_region
          %s1348 = ssub.s32 16, 16
          %1349 = vsyncadd [#allocation5], %s1348
          %1352 = dma.smem_to_hbm [#allocation4], 16, %s6, [#allocation5]
        $region56: #{qecc_equal_overlap_sq.1} parent=43 // pred_fallthru
          _
        // Predicated region
        $region57: #{qecc_equal_overlap_sq.1} parent=43 // pred_check
          %p1353 = pneg %p177
        $region58: #{qecc_equal_overlap_sq.1} parent=43 // pred_check_branch
          %1355 = sbr.rel (%p1353) target = $region60
        $region59: #{qecc_equal_overlap_sq.1} parent=43 // pred_region
          %1356 = dma.done [#allocation5], 16
        $region60: #{qecc_equal_overlap_sq.1} parent=43 // pred_fallthru
          _
        %1357 = sfence
      $region44: #{qecc_equal_overlap_sq.1} parent=5 // pred_fallthru
        _
      %p1358 = scmp.le.s32.totalorder 2, %s13
      // Predicated region
      $region61: #{qecc_equal_overlap_sq.1} parent=5 // pred_check
        %p1359 = pneg %p1358
      $region62: #{qecc_equal_overlap_sq.1} parent=5 // pred_check_branch
        %1361 = sbr.rel (%p1359) target = $region64
      $region63: #{qecc_equal_overlap_sq.1} parent=5 // pred_region
        %s1362 = ssub.s32 %s13, 2
      $region64: #{qecc_equal_overlap_sq.1} parent=5 // pred_fallthru
        _
    $region6: #{qecc_equal_overlap_sq.1} parent=1 // loop_footer
      %s17 = sadd.s32 1, %s13
    $region7: #{qecc_equal_overlap_sq.1} parent=1 // loop_footer_branch
      %12 = sbr.rel target = $region3
    $region8: #{qecc_equal_overlap_sq.1} parent=1 // loop_exit
      _
    %1363 = vsyncpa [#allocation5], 1
    %s1364 = scalar_lea.sflag [#allocation5], 1
    %1365 = vsyncpa %s1364, 1

</llo_original>
